<compile_context>
chip_gen: v6e
topology: v6e:2x2x1
jax: 0.10.0
libtpu: 0.0.40
codegen_flags: <defaults>
</compile_context>

<pallas_src>
import functools

import jax
import jax.numpy as jnp
from jax import lax
from jax.experimental import pallas as pl
from jax.experimental.pallas import tpu as pltpu

IN_FEATURES = 28 * 28     # 784
OUT_FEATURES = 10
OUT_PAD = 128             # lane-dense padded output width (sliced to 10 in wrapper)
TILE_B = 128              # batch tile (multiple of 8/16; grid-pipelined)

# Demo hidden size (module default is 5000; kernel is size-generic — weights use
# full-array blocks so any H works, including 5000).
HIDDEN = 256


def mlp_kernel(x_ref, w1_ref, b1_ref, w2_ref, b2_ref, o_ref):
    """One batch tile: relu(relu(x @ W1.T + b1) @ W2.T + b2), hidden stays in VMEM."""
    x = x_ref[...]                                    # (TILE_B, 784) bf16
    w1 = w1_ref[...]                                  # (H, 784)      bf16 (PyTorch layout)
    # x @ W1.T on the MXU, f32 accumulation. Contract dim 1 of x with dim 1 of w1
    # so no wrapper-side transpose is ever materialized in HBM.
    h = lax.dot_general(x, w1, (((1,), (1,)), ((), ())),
                        preferred_element_type=jnp.float32)   # (TILE_B, H) f32
    h = jnp.maximum(h + b1_ref[...], 0.0)             # relu1 (VPU), bias in f32
    h = h.astype(jnp.bfloat16)                        # back to bf16 for the 2nd MXU pass

    w2 = w2_ref[...]                                  # (OUT_PAD, H) bf16, rows >=10 are zero
    y = lax.dot_general(h, w2, (((1,), (1,)), ((), ())),
                        preferred_element_type=jnp.float32)   # (TILE_B, OUT_PAD) f32
    y = jnp.maximum(y + b2_ref[...], 0.0)             # relu2 on the logits (matches module)
    o_ref[...] = y                                    # lane-dense (TILE_B, 128) f32 store


@functools.partial(jax.jit, static_argnames=("tile_b",))
def mnist_net_forward(x_nchw, w1, b1, w2, b2, *, tile_b=TILE_B):
    """x_nchw: (B, 1, 28, 28) f32. Parameters in PyTorch nn.Linear layout:
       w1 (H, 784), b1 (H,), w2 (10, H), b2 (10,). Returns (B, 10) f32."""
    B = x_nchw.shape[0]
    H = w1.shape[0]

    # x.view(-1, 784) equivalent; cast activations/weights to bf16 (f32 accumulation
    # inside the kernel keeps MNIST accuracy).
    x2d = x_nchw.reshape(B, IN_FEATURES).astype(jnp.bfloat16)

    # Pad batch up to a multiple of the tile.
    b_pad = pl.cdiv(B, tile_b) * tile_b
    if b_pad != B:
        x2d = jnp.pad(x2d, ((0, b_pad - B), (0, 0)))

    # Weights stay in (out, in) layout — no transpose. (In a real deployment these
    # casts/pads would be done once at init, not per forward.)
    w1_b = w1.astype(jnp.bfloat16)                                        # (H, 784)
    w2_p = jnp.zeros((OUT_PAD, H), jnp.bfloat16).at[:OUT_FEATURES, :].set(
        w2.astype(jnp.bfloat16))                                          # (128, H)
    b1_2d = b1.reshape(1, H).astype(jnp.float32)                          # (1, H)
    b2_p = jnp.zeros((1, OUT_PAD), jnp.float32).at[0, :OUT_FEATURES].set(
        b2.astype(jnp.float32))                                           # (1, 128)

    grid = (b_pad // tile_b,)

    flops = 2 * b_pad * H * (IN_FEATURES + OUT_PAD)
    bytes_accessed = (x2d.size * 2 + w1_b.size * 2 + w2_p.size * 2
                      + b1_2d.size * 4 + b2_p.size * 4 + b_pad * OUT_PAD * 4)

    out_padded = pl.pallas_call(
        mlp_kernel,
        out_shape=jax.ShapeDtypeStruct((b_pad, OUT_PAD), jnp.float32),
        grid_spec=pltpu.PrefetchScalarGridSpec(
            num_scalar_prefetch=0,
            grid=grid,
            in_specs=[
                pl.BlockSpec((tile_b, IN_FEATURES), lambda i: (i, 0)),   # x tile
                pl.BlockSpec((H, IN_FEATURES), lambda i: (0, 0)),        # w1 resident
                pl.BlockSpec((1, H), lambda i: (0, 0)),                  # b1 resident
                pl.BlockSpec((OUT_PAD, H), lambda i: (0, 0)),            # w2 resident
                pl.BlockSpec((1, OUT_PAD), lambda i: (0, 0)),            # b2 resident
            ],
            out_specs=pl.BlockSpec((tile_b, OUT_PAD), lambda i: (i, 0)),
        ),
        compiler_params=pltpu.CompilerParams(
            dimension_semantics=("parallel",),        # shard batch tiles across TCs (v7x)
            vmem_limit_bytes=48 * 1024 * 1024,        # fits H=5000 bf16 weights everywhere
        ),
        cost_estimate=pl.CostEstimate(
            flops=flops, transcendentals=0, bytes_accessed=bytes_accessed),
    )(x2d, w1_b, b1_2d, w2_p, b2_p)

    return out_padded[:B, :OUT_FEATURES]


if __name__ == "__main__":
    key = jax.random.PRNGKey(0)
    kx, k1, k2, k3, k4 = jax.random.split(key, 5)

    B = 256  # 2 batch tiles -> exercises the grid / pipelining
    x = jax.random.normal(kx, (B, 1, 28, 28), dtype=jnp.float32)
    # PyTorch nn.Linear parameter shapes: (out_features, in_features).
    w1 = jax.random.normal(k1, (HIDDEN, IN_FEATURES), dtype=jnp.float32) * 0.02
    b1 = jax.random.normal(k2, (HIDDEN,), dtype=jnp.float32) * 0.02
    w2 = jax.random.normal(k3, (OUT_FEATURES, HIDDEN), dtype=jnp.float32) * 0.02
    b2 = jax.random.normal(k4, (OUT_FEATURES,), dtype=jnp.float32) * 0.02

    out = jax.block_until_ready(mnist_net_forward(x, w1, b1, w2, b2))

    # Pure-JAX reference with matching bf16 input/weight precision, f32 accumulation.
    xf = x.reshape(B, IN_FEATURES)
    xb = xf.astype(jnp.bfloat16).astype(jnp.float32)
    w1b = w1.astype(jnp.bfloat16).astype(jnp.float32)
    w2b = w2.astype(jnp.bfloat16).astype(jnp.float32)
    h_ref = jnp.maximum(xb @ w1b.T + b1, 0.0)
    h_ref = h_ref.astype(jnp.bfloat16).astype(jnp.float32)
    ref = jnp.maximum(h_ref @ w2b.T + b2, 0.0)

    assert out.shape == (B, OUT_FEATURES)
    assert jnp.allclose(out, ref, atol=2e-2, rtol=2e-2), (
        float(jnp.max(jnp.abs(out - ref))))

    print("KERNEL_OK")
</pallas_src>

<mosaic_0001>
module attributes {stable_mosaic.version = 11 : i64} {
  func.func @mlp_kernel(%arg0: i32, %arg1: memref<128x784xbf16, #tpu.memory_space<vmem>>, %arg2: memref<256x784xbf16, #tpu.memory_space<vmem>>, %arg3: memref<1x256xf32, #tpu.memory_space<vmem>>, %arg4: memref<128x256xbf16, #tpu.memory_space<vmem>>, %arg5: memref<1x128xf32, #tpu.memory_space<vmem>>, %arg6: memref<128x128xf32, #tpu.memory_space<vmem>>) attributes {dimension_semantics = [#tpu.dimension_semantics<parallel>], iteration_bounds = array<i64: 2>, scalar_prefetch = 0 : i64, scratch_operands = 0 : i64, tpu.core_type = #tpu.core_type<tc>, window_params = [{transform_indices = @transform_0, window_bounds = array<i64: 128, 784>}, {pipeline_mode = #tpu.pipeline_mode<synchronous>, transform_indices = @transform_1, window_bounds = array<i64: 256, 784>}, {pipeline_mode = #tpu.pipeline_mode<synchronous>, transform_indices = @transform_2, window_bounds = array<i64: 1, 256>}, {pipeline_mode = #tpu.pipeline_mode<synchronous>, transform_indices = @transform_3, window_bounds = array<i64: 128, 256>}, {pipeline_mode = #tpu.pipeline_mode<synchronous>, transform_indices = @transform_4, window_bounds = array<i64: 1, 128>}, {transform_indices = @transform_5, window_bounds = array<i64: 128, 128>}]} {
    %c0 = arith.constant 0 : index
    %c0_0 = arith.constant 0 : index
    %0 = vector.load %arg1[%c0, %c0_0] : memref<128x784xbf16, #tpu.memory_space<vmem>>, vector<128x784xbf16>
    %c0_1 = arith.constant 0 : index
    %c0_2 = arith.constant 0 : index
    %1 = vector.load %arg2[%c0_1, %c0_2] : memref<256x784xbf16, #tpu.memory_space<vmem>>, vector<256x784xbf16>
    %cst = arith.constant dense<0.000000e+00> : vector<128x256xf32>
    %2 = tpu.matmul %0, %1, %cst {dimension_numbers = #tpu.dot_dimension_numbers<[1], [1], [0], [0], [0, 0, 1, 0], [], []>} : vector<128x784xbf16>, vector<256x784xbf16>, vector<128x256xf32> -> vector<128x256xf32>
    %c0_3 = arith.constant 0 : index
    %c0_4 = arith.constant 0 : index
    %3 = vector.load %arg3[%c0_3, %c0_4] : memref<1x256xf32, #tpu.memory_space<vmem>>, vector<1x256xf32>
    %4 = vector.broadcast %3 : vector<1x256xf32> to vector<128x256xf32>
    %5 = arith.addf %2, %4 : vector<128x256xf32>
    %cst_5 = arith.constant 0.000000e+00 : f32
    %6 = vector.broadcast %cst_5 : f32 to vector<128x256xf32>
    %7 = arith.maximumf %5, %6 : vector<128x256xf32>
    %8 = arith.truncf %7 : vector<128x256xf32> to vector<128x256xbf16>
    %c0_6 = arith.constant 0 : index
    %c0_7 = arith.constant 0 : index
    %9 = vector.load %arg4[%c0_6, %c0_7] : memref<128x256xbf16, #tpu.memory_space<vmem>>, vector<128x256xbf16>
    %cst_8 = arith.constant dense<0.000000e+00> : vector<128x128xf32>
    %10 = tpu.matmul %8, %9, %cst_8 {dimension_numbers = #tpu.dot_dimension_numbers<[1], [1], [0], [0], [0, 0, 1, 0], [], []>} : vector<128x256xbf16>, vector<128x256xbf16>, vector<128x128xf32> -> vector<128x128xf32>
    %c0_9 = arith.constant 0 : index
    %c0_10 = arith.constant 0 : index
    %11 = vector.load %arg5[%c0_9, %c0_10] : memref<1x128xf32, #tpu.memory_space<vmem>>, vector<1x128xf32>
    %12 = vector.broadcast %11 : vector<1x128xf32> to vector<128x128xf32>
    %13 = arith.addf %10, %12 : vector<128x128xf32>
    %cst_11 = arith.constant 0.000000e+00 : f32
    %14 = vector.broadcast %cst_11 : f32 to vector<128x128xf32>
    %15 = arith.maximumf %13, %14 : vector<128x128xf32>
    %c0_12 = arith.constant 0 : index
    %c0_13 = arith.constant 0 : index
    %16 = vector.load %arg6[%c0_12, %c0_13] : memref<128x128xf32, #tpu.memory_space<vmem>>, vector<128x128xf32>
    tpu.vector_store %arg6[%c0_12, %c0_13], %15 {strides = array<i32>} : memref<128x128xf32, #tpu.memory_space<vmem>>, vector<128x128xf32>,
    return
  }
  func.func @transform_0(%arg0: i32) -> (i32, i32) {
    %c0_i32 = arith.constant 0 : i32
    %c0_i32_0 = arith.constant 0 : i32
    return %arg0, %c0_i32 : i32, i32
  }
  func.func @transform_1(%arg0: i32) -> (i32, i32) {
    %c0_i32 = arith.constant 0 : i32
    %c0_i32_0 = arith.constant 0 : i32
    %c0_i32_1 = arith.constant 0 : i32
    return %c0_i32, %c0_i32_0 : i32, i32
  }
  func.func @transform_2(%arg0: i32) -> (i32, i32) {
    %c0_i32 = arith.constant 0 : i32
    %c0_i32_0 = arith.constant 0 : i32
    %c0_i32_1 = arith.constant 0 : i32
    return %c0_i32, %c0_i32_0 : i32, i32
  }
  func.func @transform_3(%arg0: i32) -> (i32, i32) {
    %c0_i32 = arith.constant 0 : i32
    %c0_i32_0 = arith.constant 0 : i32
    %c0_i32_1 = arith.constant 0 : i32
    return %c0_i32, %c0_i32_0 : i32, i32
  }
  func.func @transform_4(%arg0: i32) -> (i32, i32) {
    %c0_i32 = arith.constant 0 : i32
    %c0_i32_0 = arith.constant 0 : i32
    %c0_i32_1 = arith.constant 0 : i32
    return %c0_i32, %c0_i32_0 : i32, i32
  }
  func.func @transform_5(%arg0: i32) -> (i32, i32) {
    %c0_i32 = arith.constant 0 : i32
    %c0_i32_0 = arith.constant 0 : i32
    return %arg0, %c0_i32 : i32, i32
  }
}

</mosaic_0001>

<llo_original>
// kernel: mnist_net_forward.1
$region0: #{mnist_net_forward.1}
  #allocation0 [shape = 'u32[]', space=smem, size = 0x4, offset = 0x4, fixed_abs, tag = 'smem constant byte address 0x4 - core index']
  #allocation1 [shape = 'u32[144,128]{1,0:T(1,128)}', space=vmem, size = 0x12000, scoped, tag = 'internal scratch']
  %s0 = inlined_call_operand.vmem [shape: bf16[256,784], index: 0, kind: input, shape index: {}]
  %s1 = inlined_call_operand.vmem [shape: bf16[256,784], index: 1, kind: input, shape index: {}]
  %s2 = inlined_call_operand.vmem [shape: f32[1,256], index: 2, kind: input, shape index: {}]
  %s3 = inlined_call_operand.vmem [shape: bf16[128,256], index: 3, kind: input, shape index: {}]
  %s4 = inlined_call_operand.vmem [shape: f32[1,128], index: 4, kind: input, shape index: {}]
  %s5 = inlined_call_operand.vmem [shape: f32[256,128], index: 5, kind: output, shape index: {}]
  %s6 = sld [smem:[#allocation0]]
  $region53: #{mnist_net_forward.1} parent=0
    _
  %s8 = ssub.s32 1, %s6
  %s9 = scalar_select 0, %s8, %s6
  loop: start=0, step=1, limit=4
  $region2: #{mnist_net_forward.1} parent=0 // loop_pre_header
    _
  $region3: #{mnist_net_forward.1} parent=0 // loop_header
    %s11 = sphi 0, %s15
    %p12 = scmp.ge.s32.totalorder %s11, 4
    %s21 = sphi 0, %s23
    %s24 = sphi 0, %s21
    %s25 = sphi 0, %s24
    %s41 = sphi 0, %s25
    %s45 = sphi 0, %s45
    %s47 = sphi 0, %s45
    %s48 = sphi 0, %s47
    %s62 = sphi 0, %s48
    %s66 = sphi 0, %s66
    %s68 = sphi 0, %s66
    %s69 = sphi 0, %s68
    %s83 = sphi 0, %s69
    %s87 = sphi 0, %s87
    %s89 = sphi 0, %s87
    %s90 = sphi 0, %s89
    %s104 = sphi 0, %s90
    %s108 = sphi 0, %s108
    %s110 = sphi 0, %s108
    %s111 = sphi 0, %s110
    %s125 = sphi 0, %s111
    %s131 = sphi 0, %s133
    %s134 = sphi 0, %s131
    %s135 = sphi 0, %s134
    %s151 = sphi 0, %s135
  $region4: #{mnist_net_forward.1} parent=0 // loop_header_branch
    %14 = sbr.rel (%p12) target = $region8
  $region5: #{mnist_net_forward.1} parent=0 // loop_body
    %s16 = ssub.s32 %s11, 1
    %s17 = ssub.s32 %s11, 2
    %s18 = sadd.s32 %s11, 1
    %s19 = ssub.s32 %s11, %s18
    %p20 = scmp.eq.s32.totalorder %s19, 0
    %s22 = sadd.s32 %s21, 1
    %s23 = scalar_select %p20, %s21, %s22
    %p26 = pneg %p20
    %p27 = scmp.eq.s32.totalorder %s11, 1
    %p28 = por %p26, %p27
    %p29 = scmp.ne.s32.totalorder %s21, %s24
    %p30 = scmp.eq.s32.totalorder %s11, 0
    %p31 = por %p29, %p30
    %p32 = scmp.ne.s32.totalorder %s21, %s24
    %p33 = scmp.eq.s32.totalorder %s16, 1
    %p34 = por %p32, %p33
    %p35 = scmp.ne.s32.totalorder %s24, %s25
    %p36 = scmp.eq.s32.totalorder %s16, 0
    %p37 = por %p35, %p36
    %p38 = scmp.ne.s32.totalorder %s24, %s25
    %p39 = scmp.eq.s32.totalorder %s17, 1
    %p40 = por %p38, %p39
    %p42 = scmp.ne.s32.totalorder %s25, %s41
    %p43 = scmp.eq.s32.totalorder %s17, 0
    %p44 = por %p42, %p43
    %s46 = sadd.s32 %s45, 1
    %p49 = scmp.eq.s32.totalorder %s11, 1
    %p50 = scmp.ne.s32.totalorder %s45, %s47
    %p51 = scmp.eq.s32.totalorder %s11, 0
    %p52 = por %p50, %p51
    %p53 = scmp.ne.s32.totalorder %s45, %s47
    %p54 = scmp.eq.s32.totalorder %s16, 1
    %p55 = por %p53, %p54
    %p56 = scmp.ne.s32.totalorder %s47, %s48
    %p57 = scmp.eq.s32.totalorder %s16, 0
    %p58 = por %p56, %p57
    %p59 = scmp.ne.s32.totalorder %s47, %s48
    %p60 = scmp.eq.s32.totalorder %s17, 1
    %p61 = por %p59, %p60
    %p63 = scmp.ne.s32.totalorder %s48, %s62
    %p64 = scmp.eq.s32.totalorder %s17, 0
    %p65 = por %p63, %p64
    %s67 = sadd.s32 %s66, 1
    %p70 = scmp.eq.s32.totalorder %s11, 1
    %p71 = scmp.ne.s32.totalorder %s66, %s68
    %p72 = scmp.eq.s32.totalorder %s11, 0
    %p73 = por %p71, %p72
    %p74 = scmp.ne.s32.totalorder %s66, %s68
    %p75 = scmp.eq.s32.totalorder %s16, 1
    %p76 = por %p74, %p75
    %p77 = scmp.ne.s32.totalorder %s68, %s69
    %p78 = scmp.eq.s32.totalorder %s16, 0
    %p79 = por %p77, %p78
    %p80 = scmp.ne.s32.totalorder %s68, %s69
    %p81 = scmp.eq.s32.totalorder %s17, 1
    %p82 = por %p80, %p81
    %p84 = scmp.ne.s32.totalorder %s69, %s83
    %p85 = scmp.eq.s32.totalorder %s17, 0
    %p86 = por %p84, %p85
    %s88 = sadd.s32 %s87, 1
    %p91 = scmp.eq.s32.totalorder %s11, 1
    %p92 = scmp.ne.s32.totalorder %s87, %s89
    %p93 = scmp.eq.s32.totalorder %s11, 0
    %p94 = por %p92, %p93
    %p95 = scmp.ne.s32.totalorder %s87, %s89
    %p96 = scmp.eq.s32.totalorder %s16, 1
    %p97 = por %p95, %p96
    %p98 = scmp.ne.s32.totalorder %s89, %s90
    %p99 = scmp.eq.s32.totalorder %s16, 0
    %p100 = por %p98, %p99
    %p101 = scmp.ne.s32.totalorder %s89, %s90
    %p102 = scmp.eq.s32.totalorder %s17, 1
    %p103 = por %p101, %p102
    %p105 = scmp.ne.s32.totalorder %s90, %s104
    %p106 = scmp.eq.s32.totalorder %s17, 0
    %p107 = por %p105, %p106
    %s109 = sadd.s32 %s108, 1
    %p112 = scmp.eq.s32.totalorder %s11, 1
    %p113 = scmp.ne.s32.totalorder %s108, %s110
    %p114 = scmp.eq.s32.totalorder %s11, 0
    %p115 = por %p113, %p114
    %p116 = scmp.ne.s32.totalorder %s108, %s110
    %p117 = scmp.eq.s32.totalorder %s16, 1
    %p118 = por %p116, %p117
    %p119 = scmp.ne.s32.totalorder %s110, %s111
    %p120 = scmp.eq.s32.totalorder %s16, 0
    %p121 = por %p119, %p120
    %p122 = scmp.ne.s32.totalorder %s110, %s111
    %p123 = scmp.eq.s32.totalorder %s17, 1
    %p124 = por %p122, %p123
    %p126 = scmp.ne.s32.totalorder %s111, %s125
    %p127 = scmp.eq.s32.totalorder %s17, 0
    %p128 = por %p126, %p127
    %s129 = ssub.s32 %s11, %s18
    %p130 = scmp.eq.s32.totalorder %s129, 0
    %s132 = sadd.s32 %s131, 1
    %s133 = scalar_select %p130, %s131, %s132
    %p136 = pneg %p130
    %p137 = scmp.eq.s32.totalorder %s11, 1
    %p138 = por %p136, %p137
    %p139 = scmp.ne.s32.totalorder %s131, %s134
    %p140 = scmp.eq.s32.totalorder %s11, 0
    %p141 = por %p139, %p140
    %p142 = scmp.ne.s32.totalorder %s131, %s134
    %p143 = scmp.eq.s32.totalorder %s16, 1
    %p144 = por %p142, %p143
    %p145 = scmp.ne.s32.totalorder %s134, %s135
    %p146 = scmp.eq.s32.totalorder %s16, 0
    %p147 = por %p145, %p146
    %p148 = scmp.ne.s32.totalorder %s134, %s135
    %p149 = scmp.eq.s32.totalorder %s17, 1
    %p150 = por %p148, %p149
    %p152 = scmp.ne.s32.totalorder %s135, %s151
    %p153 = scmp.eq.s32.totalorder %s17, 0
    %p154 = por %p152, %p153
    %p155 = scmp.le.s32.totalorder 1, %s11
    %p156 = scmp.lt.s32.totalorder %s11, 3
    %p157 = pnand %p155, %p156
    %p158 = pneg %p157
    // Predicated region
    $region9: #{mnist_net_forward.1} parent=5 // pred_check
      _
    $region10: #{mnist_net_forward.1} parent=5 // pred_check_branch
      %160 = sbr.rel (%p157) target = $region12
    $region11: #{mnist_net_forward.1} parent=5 // pred_region
      %s161 = ssub.s32 %s11, 1
      // Predicated region
      $region13: #{mnist_net_forward.1} parent=11 // pred_check
        %p162 = pneg %p58
      $region14: #{mnist_net_forward.1} parent=11 // pred_check_branch
        %164 = sbr.rel (%p162) target = $region16
      $region15: #{mnist_net_forward.1} parent=11 // pred_region
        _
      $region16: #{mnist_net_forward.1} parent=11 // pred_fallthru
        _
      // Predicated region
      $region17: #{mnist_net_forward.1} parent=11 // pred_check
        %p165 = pneg %p79
      $region18: #{mnist_net_forward.1} parent=11 // pred_check_branch
        %167 = sbr.rel (%p165) target = $region20
      $region19: #{mnist_net_forward.1} parent=11 // pred_region
        _
      $region20: #{mnist_net_forward.1} parent=11 // pred_fallthru
        _
      // Predicated region
      $region21: #{mnist_net_forward.1} parent=11 // pred_check
        %p168 = pneg %p100
      $region22: #{mnist_net_forward.1} parent=11 // pred_check_branch
        %170 = sbr.rel (%p168) target = $region24
      $region23: #{mnist_net_forward.1} parent=11 // pred_region
        _
      $region24: #{mnist_net_forward.1} parent=11 // pred_fallthru
        _
      // Predicated region
      $region25: #{mnist_net_forward.1} parent=11 // pred_check
        %p171 = pneg %p121
      $region26: #{mnist_net_forward.1} parent=11 // pred_check_branch
        %173 = sbr.rel (%p171) target = $region28
      $region27: #{mnist_net_forward.1} parent=11 // pred_region
        _
      $region28: #{mnist_net_forward.1} parent=11 // pred_fallthru
        _
    $region12: #{mnist_net_forward.1} parent=5 // pred_fallthru
      _
    %p174 = scmp.lt.s32.totalorder %s11, 2
    // Predicated region
    $region29: #{mnist_net_forward.1} parent=5 // pred_check
      %p175 = pneg %p174
    $region30: #{mnist_net_forward.1} parent=5 // pred_check_branch
      %177 = sbr.rel (%p175) target = $region32
    $region31: #{mnist_net_forward.1} parent=5 // pred_region
      // Predicated region
      $region33: #{mnist_net_forward.1} parent=31 // pred_check
        %p178 = pneg %p31
      $region34: #{mnist_net_forward.1} parent=31 // pred_check_branch
        %180 = sbr.rel (%p178) target = $region36
      $region35: #{mnist_net_forward.1} parent=31 // pred_region
        %s181 = smul.u32 16, %s11
        %p182 = scmp.lt.s32.totalorder %s181, 31
        %s183 = scalar_select %p182, %s181, 31
        %s184 = smul.addr %s183, 7
        %s185 = smul.addr %s184, 4
        %s186 = scalar_lea.vmem %s0, %s185
        %s187 = smul.u32 16, %s11
      $region36: #{mnist_net_forward.1} parent=31 // pred_fallthru
        _
    $region32: #{mnist_net_forward.1} parent=5 // pred_fallthru
      _
    %p188 = scmp.le.s32.totalorder 1, %s11
    %p189 = scmp.lt.s32.totalorder %s11, 3
    %p190 = pnand %p188, %p189
    %p191 = pneg %p190
    // Predicated region
    $region37: #{mnist_net_forward.1} parent=5 // pred_check
      _
    $region38: #{mnist_net_forward.1} parent=5 // pred_check_branch
      %193 = sbr.rel (%p190) target = $region40
    $region39: #{mnist_net_forward.1} parent=5 // pred_region
      %s194 = ssub.s32 %s11, 1
      %s195 = smul.u32 16, %s16
      %p196 = scmp.lt.s32.totalorder %s195, 31
      %s197 = scalar_select %p196, %s195, 31
      %s198 = smul.addr %s197, 7
      %s199 = smul.addr %s198, 4
      %s200 = scalar_lea.vmem %s0, %s199
      %p201 = pneg %p37
      %p202 = pneg %p34
      %p203 = pneg %p58
      %p204 = pneg %p55
      %p205 = pneg %p79
      %p206 = pneg %p76
      %p207 = pneg %p100
      %p208 = pneg %p97
      %p209 = pneg %p121
      %p210 = pneg %p118
      %p211 = pneg %p147
      %p212 = pneg %p144
      %s213 = smul.u32 16, %s16
      %p214 = scmp.lt.s32.totalorder %s213, 31
      %s215 = scalar_select %p214, %s213, 31
      %s216 = smul.addr %s215, 8
      %s217 = scalar_lea.vmem %s5, %s216
      %s218 = smul.u32 16, %s16
      %p219 = scmp.lt.s32.totalorder %s218, 31
      %s220 = scalar_select %p219, %s218, 31
      %s221 = smul.addr %s220, 7
      %s222 = smul.addr %s221, 4
      %s223 = scalar_lea.vmem %s0, %s222
      %s224 = smul.u32 16, %s16
      %s225 = smul.u32 16, %s16
      %p226 = scmp.lt.s32.totalorder %s225, 31
      %s227 = scalar_select %p226, %s225, 31
      %s228 = smul.addr %s227, 8
      %s229 = scalar_lea.vmem %s5, %s228
      %s230 = smul.u32 16, %s16
      %v232 = vld [vmem:[%s223] sm:$0xff]
      %v233 = vld [vmem:[%s223 + $0x8] sm:$0xff]
      %v234 = vld [vmem:[%s223 + $0x10] sm:$0xff]
      %v235 = vld [vmem:[%s223 + $0x18] sm:$0xf]
      %v236 = vld [vmem:[%s223 + $0x1c] sm:$0xff]
      %v237 = vld [vmem:[%s223 + $0x24] sm:$0xff]
      %v238 = vld [vmem:[%s223 + $0x2c] sm:$0xff]
      %v239 = vld [vmem:[%s223 + $0x34] sm:$0xf]
      %v240 = vld [vmem:[%s223 + $0x38] sm:$0xff]
      %v241 = vld [vmem:[%s223 + $0x40] sm:$0xff]
      %v242 = vld [vmem:[%s223 + $0x48] sm:$0xff]
      %v243 = vld [vmem:[%s223 + $0x50] sm:$0xf]
      %v244 = vld [vmem:[%s223 + $0x54] sm:$0xff]
      %v245 = vld [vmem:[%s223 + $0x5c] sm:$0xff]
      %v246 = vld [vmem:[%s223 + $0x64] sm:$0xff]
      %v247 = vld [vmem:[%s223 + $0x6c] sm:$0xf]
      %v248 = vld [vmem:[%s223 + $0x70] sm:$0xff]
      %v249 = vld [vmem:[%s223 + $0x78] sm:$0xff]
      %v250 = vld [vmem:[%s223 + $0x80] sm:$0xff]
      %v251 = vld [vmem:[%s223 + $0x88] sm:$0xf]
      %v252 = vld [vmem:[%s223 + $0x8c] sm:$0xff]
      %v253 = vld [vmem:[%s223 + $0x94] sm:$0xff]
      %v254 = vld [vmem:[%s223 + $0x9c] sm:$0xff]
      %v255 = vld [vmem:[%s223 + $0xa4] sm:$0xf]
      %v256 = vld [vmem:[%s223 + $0xa8] sm:$0xff]
      %v257 = vld [vmem:[%s223 + $0xb0] sm:$0xff]
      %v258 = vld [vmem:[%s223 + $0xb8] sm:$0xff]
      %v259 = vld [vmem:[%s223 + $0xc0] sm:$0xf]
      %v260 = vld [vmem:[%s223 + $0xc4] sm:$0xff]
      %v261 = vld [vmem:[%s223 + $0xcc] sm:$0xff]
      %v262 = vld [vmem:[%s223 + $0xd4] sm:$0xff]
      %v263 = vld [vmem:[%s223 + $0xdc] sm:$0xf]
      %v264 = vld [vmem:[%s223 + $0xe0] sm:$0xff]
      %v265 = vld [vmem:[%s223 + $0xe8] sm:$0xff]
      %v266 = vld [vmem:[%s223 + $0xf0] sm:$0xff]
      %v267 = vld [vmem:[%s223 + $0xf8] sm:$0xf]
      %v268 = vld [vmem:[%s223 + $0xfc] sm:$0xff]
      %v269 = vld [vmem:[%s223 + $0x104] sm:$0xff]
      %v270 = vld [vmem:[%s223 + $0x10c] sm:$0xff]
      %v271 = vld [vmem:[%s223 + $0x114] sm:$0xf]
      %v272 = vld [vmem:[%s223 + $0x118] sm:$0xff]
      %v273 = vld [vmem:[%s223 + $0x120] sm:$0xff]
      %v274 = vld [vmem:[%s223 + $0x128] sm:$0xff]
      %v275 = vld [vmem:[%s223 + $0x130] sm:$0xf]
      %v276 = vld [vmem:[%s223 + $0x134] sm:$0xff]
      %v277 = vld [vmem:[%s223 + $0x13c] sm:$0xff]
      %v278 = vld [vmem:[%s223 + $0x144] sm:$0xff]
      %v279 = vld [vmem:[%s223 + $0x14c] sm:$0xf]
      %v280 = vld [vmem:[%s223 + $0x150] sm:$0xff]
      %v281 = vld [vmem:[%s223 + $0x158] sm:$0xff]
      %v282 = vld [vmem:[%s223 + $0x160] sm:$0xff]
      %v283 = vld [vmem:[%s223 + $0x168] sm:$0xf]
      %v284 = vld [vmem:[%s223 + $0x16c] sm:$0xff]
      %v285 = vld [vmem:[%s223 + $0x174] sm:$0xff]
      %v286 = vld [vmem:[%s223 + $0x17c] sm:$0xff]
      %v287 = vld [vmem:[%s223 + $0x184] sm:$0xf]
      %v288 = vld [vmem:[%s223 + $0x188] sm:$0xff]
      %v289 = vld [vmem:[%s223 + $0x190] sm:$0xff]
      %v290 = vld [vmem:[%s223 + $0x198] sm:$0xff]
      %v291 = vld [vmem:[%s223 + $0x1a0] sm:$0xf]
      %v292 = vld [vmem:[%s223 + $0x1a4] sm:$0xff]
      %v293 = vld [vmem:[%s223 + $0x1ac] sm:$0xff]
      %v294 = vld [vmem:[%s223 + $0x1b4] sm:$0xff]
      %v295 = vld [vmem:[%s223 + $0x1bc] sm:$0xf]
      %v296 = vld [vmem:[%s1] sm:$0xff]
      %v297 = vld [vmem:[%s1 + $0x8] sm:$0xff]
      %v298 = vld [vmem:[%s1 + $0x10] sm:$0xff]
      %v299 = vld [vmem:[%s1 + $0x18] sm:$0xf]
      %v300 = vld [vmem:[%s1 + $0x1c] sm:$0xff]
      %v301 = vld [vmem:[%s1 + $0x24] sm:$0xff]
      %v302 = vld [vmem:[%s1 + $0x2c] sm:$0xff]
      %v303 = vld [vmem:[%s1 + $0x34] sm:$0xf]
      %v304 = vld [vmem:[%s1 + $0x38] sm:$0xff]
      %v305 = vld [vmem:[%s1 + $0x40] sm:$0xff]
      %v306 = vld [vmem:[%s1 + $0x48] sm:$0xff]
      %v307 = vld [vmem:[%s1 + $0x50] sm:$0xf]
      %v308 = vld [vmem:[%s1 + $0x54] sm:$0xff]
      %v309 = vld [vmem:[%s1 + $0x5c] sm:$0xff]
      %v310 = vld [vmem:[%s1 + $0x64] sm:$0xff]
      %v311 = vld [vmem:[%s1 + $0x6c] sm:$0xf]
      %v312 = vld [vmem:[%s1 + $0x70] sm:$0xff]
      %v313 = vld [vmem:[%s1 + $0x78] sm:$0xff]
      %v314 = vld [vmem:[%s1 + $0x80] sm:$0xff]
      %v315 = vld [vmem:[%s1 + $0x88] sm:$0xf]
      %v316 = vld [vmem:[%s1 + $0x8c] sm:$0xff]
      %v317 = vld [vmem:[%s1 + $0x94] sm:$0xff]
      %v318 = vld [vmem:[%s1 + $0x9c] sm:$0xff]
      %v319 = vld [vmem:[%s1 + $0xa4] sm:$0xf]
      %v320 = vld [vmem:[%s1 + $0xa8] sm:$0xff]
      %v321 = vld [vmem:[%s1 + $0xb0] sm:$0xff]
      %v322 = vld [vmem:[%s1 + $0xb8] sm:$0xff]
      %v323 = vld [vmem:[%s1 + $0xc0] sm:$0xf]
      %v324 = vld [vmem:[%s1 + $0xc4] sm:$0xff]
      %v325 = vld [vmem:[%s1 + $0xcc] sm:$0xff]
      %v326 = vld [vmem:[%s1 + $0xd4] sm:$0xff]
      %v327 = vld [vmem:[%s1 + $0xdc] sm:$0xf]
      %v328 = vld [vmem:[%s1 + $0xe0] sm:$0xff]
      %v329 = vld [vmem:[%s1 + $0xe8] sm:$0xff]
      %v330 = vld [vmem:[%s1 + $0xf0] sm:$0xff]
      %v331 = vld [vmem:[%s1 + $0xf8] sm:$0xf]
      %v332 = vld [vmem:[%s1 + $0xfc] sm:$0xff]
      %v333 = vld [vmem:[%s1 + $0x104] sm:$0xff]
      %v334 = vld [vmem:[%s1 + $0x10c] sm:$0xff]
      %v335 = vld [vmem:[%s1 + $0x114] sm:$0xf]
      %v336 = vld [vmem:[%s1 + $0x118] sm:$0xff]
      %v337 = vld [vmem:[%s1 + $0x120] sm:$0xff]
      %v338 = vld [vmem:[%s1 + $0x128] sm:$0xff]
      %v339 = vld [vmem:[%s1 + $0x130] sm:$0xf]
      %v340 = vld [vmem:[%s1 + $0x134] sm:$0xff]
      %v341 = vld [vmem:[%s1 + $0x13c] sm:$0xff]
      %v342 = vld [vmem:[%s1 + $0x144] sm:$0xff]
      %v343 = vld [vmem:[%s1 + $0x14c] sm:$0xf]
      %v344 = vld [vmem:[%s1 + $0x150] sm:$0xff]
      %v345 = vld [vmem:[%s1 + $0x158] sm:$0xff]
      %v346 = vld [vmem:[%s1 + $0x160] sm:$0xff]
      %v347 = vld [vmem:[%s1 + $0x168] sm:$0xf]
      %v348 = vld [vmem:[%s1 + $0x16c] sm:$0xff]
      %v349 = vld [vmem:[%s1 + $0x174] sm:$0xff]
      %v350 = vld [vmem:[%s1 + $0x17c] sm:$0xff]
      %v351 = vld [vmem:[%s1 + $0x184] sm:$0xf]
      %v352 = vld [vmem:[%s1 + $0x188] sm:$0xff]
      %v353 = vld [vmem:[%s1 + $0x190] sm:$0xff]
      %v354 = vld [vmem:[%s1 + $0x198] sm:$0xff]
      %v355 = vld [vmem:[%s1 + $0x1a0] sm:$0xf]
      %v356 = vld [vmem:[%s1 + $0x1a4] sm:$0xff]
      %v357 = vld [vmem:[%s1 + $0x1ac] sm:$0xff]
      %v358 = vld [vmem:[%s1 + $0x1b4] sm:$0xff]
      %v359 = vld [vmem:[%s1 + $0x1bc] sm:$0xf]
      %v360 = vld [vmem:[%s1 + $0x1c0] sm:$0xff]
      %v361 = vld [vmem:[%s1 + $0x1c8] sm:$0xff]
      %v362 = vld [vmem:[%s1 + $0x1d0] sm:$0xff]
      %v363 = vld [vmem:[%s1 + $0x1d8] sm:$0xf]
      %v364 = vld [vmem:[%s1 + $0x1dc] sm:$0xff]
      %v365 = vld [vmem:[%s1 + $0x1e4] sm:$0xff]
      %v366 = vld [vmem:[%s1 + $0x1ec] sm:$0xff]
      %v367 = vld [vmem:[%s1 + $0x1f4] sm:$0xf]
      %v368 = vld [vmem:[%s1 + $0x1f8] sm:$0xff]
      %v369 = vld [vmem:[%s1 + $0x200] sm:$0xff]
      %v370 = vld [vmem:[%s1 + $0x208] sm:$0xff]
      %v371 = vld [vmem:[%s1 + $0x210] sm:$0xf]
      %v372 = vld [vmem:[%s1 + $0x214] sm:$0xff]
      %v373 = vld [vmem:[%s1 + $0x21c] sm:$0xff]
      %v374 = vld [vmem:[%s1 + $0x224] sm:$0xff]
      %v375 = vld [vmem:[%s1 + $0x22c] sm:$0xf]
      %v376 = vld [vmem:[%s1 + $0x230] sm:$0xff]
      %v377 = vld [vmem:[%s1 + $0x238] sm:$0xff]
      %v378 = vld [vmem:[%s1 + $0x240] sm:$0xff]
      %v379 = vld [vmem:[%s1 + $0x248] sm:$0xf]
      %v380 = vld [vmem:[%s1 + $0x24c] sm:$0xff]
      %v381 = vld [vmem:[%s1 + $0x254] sm:$0xff]
      %v382 = vld [vmem:[%s1 + $0x25c] sm:$0xff]
      %v383 = vld [vmem:[%s1 + $0x264] sm:$0xf]
      %v384 = vld [vmem:[%s1 + $0x268] sm:$0xff]
      %v385 = vld [vmem:[%s1 + $0x270] sm:$0xff]
      %v386 = vld [vmem:[%s1 + $0x278] sm:$0xff]
      %v387 = vld [vmem:[%s1 + $0x280] sm:$0xf]
      %v388 = vld [vmem:[%s1 + $0x284] sm:$0xff]
      %v389 = vld [vmem:[%s1 + $0x28c] sm:$0xff]
      %v390 = vld [vmem:[%s1 + $0x294] sm:$0xff]
      %v391 = vld [vmem:[%s1 + $0x29c] sm:$0xf]
      %v392 = vld [vmem:[%s1 + $0x2a0] sm:$0xff]
      %v393 = vld [vmem:[%s1 + $0x2a8] sm:$0xff]
      %v394 = vld [vmem:[%s1 + $0x2b0] sm:$0xff]
      %v395 = vld [vmem:[%s1 + $0x2b8] sm:$0xf]
      %v396 = vld [vmem:[%s1 + $0x2bc] sm:$0xff]
      %v397 = vld [vmem:[%s1 + $0x2c4] sm:$0xff]
      %v398 = vld [vmem:[%s1 + $0x2cc] sm:$0xff]
      %v399 = vld [vmem:[%s1 + $0x2d4] sm:$0xf]
      %v400 = vld [vmem:[%s1 + $0x2d8] sm:$0xff]
      %v401 = vld [vmem:[%s1 + $0x2e0] sm:$0xff]
      %v402 = vld [vmem:[%s1 + $0x2e8] sm:$0xff]
      %v403 = vld [vmem:[%s1 + $0x2f0] sm:$0xf]
      %v404 = vld [vmem:[%s1 + $0x2f4] sm:$0xff]
      %v405 = vld [vmem:[%s1 + $0x2fc] sm:$0xff]
      %v406 = vld [vmem:[%s1 + $0x304] sm:$0xff]
      %v407 = vld [vmem:[%s1 + $0x30c] sm:$0xf]
      %v408 = vld [vmem:[%s1 + $0x310] sm:$0xff]
      %v409 = vld [vmem:[%s1 + $0x318] sm:$0xff]
      %v410 = vld [vmem:[%s1 + $0x320] sm:$0xff]
      %v411 = vld [vmem:[%s1 + $0x328] sm:$0xf]
      %v412 = vld [vmem:[%s1 + $0x32c] sm:$0xff]
      %v413 = vld [vmem:[%s1 + $0x334] sm:$0xff]
      %v414 = vld [vmem:[%s1 + $0x33c] sm:$0xff]
      %v415 = vld [vmem:[%s1 + $0x344] sm:$0xf]
      %v416 = vld [vmem:[%s1 + $0x348] sm:$0xff]
      %v417 = vld [vmem:[%s1 + $0x350] sm:$0xff]
      %v418 = vld [vmem:[%s1 + $0x358] sm:$0xff]
      %v419 = vld [vmem:[%s1 + $0x360] sm:$0xf]
      %v420 = vld [vmem:[%s1 + $0x364] sm:$0xff]
      %v421 = vld [vmem:[%s1 + $0x36c] sm:$0xff]
      %v422 = vld [vmem:[%s1 + $0x374] sm:$0xff]
      %v423 = vld [vmem:[%s1 + $0x37c] sm:$0xf]
      %v424 = vld [vmem:[%s2] sm:$0x3]
      %v426 = vlaneseq
      %v427 = vshrl.u32 %v426, 7
      %v428 = vsub.s32 0, %v427
      %v429 = vrot.slane %v424, %v428
      %v430 = vlaneseq
      %v431 = vshrl.u32 %v430, 7
      %v432 = vsub.s32 1, %v431
      %v433 = vrot.slane %v424, %v432
      %v500 = vunpack.c.l.b16 %v232
      %v501 = vunpack.c.h.b16 %v232
      %v502 = vunpack.c.l.b16 %v233
      %v503 = vunpack.c.h.b16 %v233
      %v504 = vunpack.c.l.b16 %v234
      %v505 = vunpack.c.h.b16 %v234
      %v506 = vunpack.c.l.b16 %v235
      %v507 = vunpack.c.l.b16 %v236
      %v508 = vunpack.c.h.b16 %v236
      %v509 = vunpack.c.l.b16 %v237
      %v510 = vunpack.c.h.b16 %v237
      %v511 = vunpack.c.l.b16 %v238
      %v512 = vunpack.c.h.b16 %v238
      %v513 = vunpack.c.l.b16 %v239
      %v514 = vunpack.c.l.b16 %v240
      %v515 = vunpack.c.h.b16 %v240
      %v516 = vunpack.c.l.b16 %v241
      %v517 = vunpack.c.h.b16 %v241
      %v518 = vunpack.c.l.b16 %v242
      %v519 = vunpack.c.h.b16 %v242
      %v520 = vunpack.c.l.b16 %v243
      %v521 = vunpack.c.l.b16 %v244
      %v522 = vunpack.c.h.b16 %v244
      %v523 = vunpack.c.l.b16 %v245
      %v524 = vunpack.c.h.b16 %v245
      %v525 = vunpack.c.l.b16 %v246
      %v526 = vunpack.c.h.b16 %v246
      %v527 = vunpack.c.l.b16 %v247
      %v528 = vunpack.c.l.b16 %v248
      %v529 = vunpack.c.h.b16 %v248
      %v530 = vunpack.c.l.b16 %v249
      %v531 = vunpack.c.h.b16 %v249
      %v532 = vunpack.c.l.b16 %v250
      %v533 = vunpack.c.h.b16 %v250
      %v534 = vunpack.c.l.b16 %v251
      %v535 = vunpack.c.l.b16 %v252
      %v536 = vunpack.c.h.b16 %v252
      %v537 = vunpack.c.l.b16 %v253
      %v538 = vunpack.c.h.b16 %v253
      %v539 = vunpack.c.l.b16 %v254
      %v540 = vunpack.c.h.b16 %v254
      %v541 = vunpack.c.l.b16 %v255
      %v542 = vunpack.c.l.b16 %v256
      %v543 = vunpack.c.h.b16 %v256
      %v544 = vunpack.c.l.b16 %v257
      %v545 = vunpack.c.h.b16 %v257
      %v546 = vunpack.c.l.b16 %v258
      %v547 = vunpack.c.h.b16 %v258
      %v548 = vunpack.c.l.b16 %v259
      %v549 = vunpack.c.l.b16 %v260
      %v550 = vunpack.c.h.b16 %v260
      %v551 = vunpack.c.l.b16 %v261
      %v552 = vunpack.c.h.b16 %v261
      %v553 = vunpack.c.l.b16 %v262
      %v554 = vunpack.c.h.b16 %v262
      %v555 = vunpack.c.l.b16 %v263
      %v556 = vunpack.c.l.b16 %v264
      %v557 = vunpack.c.h.b16 %v264
      %v558 = vunpack.c.l.b16 %v265
      %v559 = vunpack.c.h.b16 %v265
      %v560 = vunpack.c.l.b16 %v266
      %v561 = vunpack.c.h.b16 %v266
      %v562 = vunpack.c.l.b16 %v267
      %v563 = vunpack.c.l.b16 %v268
      %v564 = vunpack.c.h.b16 %v268
      %v565 = vunpack.c.l.b16 %v269
      %v566 = vunpack.c.h.b16 %v269
      %v567 = vunpack.c.l.b16 %v270
      %v568 = vunpack.c.h.b16 %v270
      %v569 = vunpack.c.l.b16 %v271
      %v570 = vunpack.c.l.b16 %v272
      %v571 = vunpack.c.h.b16 %v272
      %v572 = vunpack.c.l.b16 %v273
      %v573 = vunpack.c.h.b16 %v273
      %v574 = vunpack.c.l.b16 %v274
      %v575 = vunpack.c.h.b16 %v274
      %v576 = vunpack.c.l.b16 %v275
      %v577 = vunpack.c.l.b16 %v276
      %v578 = vunpack.c.h.b16 %v276
      %v579 = vunpack.c.l.b16 %v277
      %v580 = vunpack.c.h.b16 %v277
      %v581 = vunpack.c.l.b16 %v278
      %v582 = vunpack.c.h.b16 %v278
      %v583 = vunpack.c.l.b16 %v279
      %v584 = vunpack.c.l.b16 %v280
      %v585 = vunpack.c.h.b16 %v280
      %v586 = vunpack.c.l.b16 %v281
      %v587 = vunpack.c.h.b16 %v281
      %v588 = vunpack.c.l.b16 %v282
      %v589 = vunpack.c.h.b16 %v282
      %v590 = vunpack.c.l.b16 %v283
      %v591 = vunpack.c.l.b16 %v284
      %v592 = vunpack.c.h.b16 %v284
      %v593 = vunpack.c.l.b16 %v285
      %v594 = vunpack.c.h.b16 %v285
      %v595 = vunpack.c.l.b16 %v286
      %v596 = vunpack.c.h.b16 %v286
      %v597 = vunpack.c.l.b16 %v287
      %v598 = vunpack.c.l.b16 %v288
      %v599 = vunpack.c.h.b16 %v288
      %v600 = vunpack.c.l.b16 %v289
      %v601 = vunpack.c.h.b16 %v289
      %v602 = vunpack.c.l.b16 %v290
      %v603 = vunpack.c.h.b16 %v290
      %v604 = vunpack.c.l.b16 %v291
      %v605 = vunpack.c.l.b16 %v292
      %v606 = vunpack.c.h.b16 %v292
      %v607 = vunpack.c.l.b16 %v293
      %v608 = vunpack.c.h.b16 %v293
      %v609 = vunpack.c.l.b16 %v294
      %v610 = vunpack.c.h.b16 %v294
      %v611 = vunpack.c.l.b16 %v295
      %v612 = vpack.c.b16 %v507, %v500
      %v613 = vpack.c.b16 %v508, %v501
      %v614 = vpack.c.b16 %v509, %v502
      %v615 = vpack.c.b16 %v510, %v503
      %v616 = vpack.c.b16 %v511, %v504
      %v617 = vpack.c.b16 %v512, %v505
      %v618 = vpack.c.b16 %v513, %v506
      %v619 = vpack.c.b16 %v521, %v514
      %v620 = vpack.c.b16 %v522, %v515
      %v621 = vpack.c.b16 %v523, %v516
      %v622 = vpack.c.b16 %v524, %v517
      %v623 = vpack.c.b16 %v525, %v518
      %v624 = vpack.c.b16 %v526, %v519
      %v625 = vpack.c.b16 %v527, %v520
      %v626 = vpack.c.b16 %v535, %v528
      %v627 = vpack.c.b16 %v536, %v529
      %v628 = vpack.c.b16 %v537, %v530
      %v629 = vpack.c.b16 %v538, %v531
      %v630 = vpack.c.b16 %v539, %v532
      %v631 = vpack.c.b16 %v540, %v533
      %v632 = vpack.c.b16 %v541, %v534
      %v633 = vpack.c.b16 %v549, %v542
      %v634 = vpack.c.b16 %v550, %v543
      %v635 = vpack.c.b16 %v551, %v544
      %v636 = vpack.c.b16 %v552, %v545
      %v637 = vpack.c.b16 %v553, %v546
      %v638 = vpack.c.b16 %v554, %v547
      %v639 = vpack.c.b16 %v555, %v548
      %v640 = vpack.c.b16 %v563, %v556
      %v641 = vpack.c.b16 %v564, %v557
      %v642 = vpack.c.b16 %v565, %v558
      %v643 = vpack.c.b16 %v566, %v559
      %v644 = vpack.c.b16 %v567, %v560
      %v645 = vpack.c.b16 %v568, %v561
      %v646 = vpack.c.b16 %v569, %v562
      %v647 = vpack.c.b16 %v577, %v570
      %v648 = vpack.c.b16 %v578, %v571
      %v649 = vpack.c.b16 %v579, %v572
      %v650 = vpack.c.b16 %v580, %v573
      %v651 = vpack.c.b16 %v581, %v574
      %v652 = vpack.c.b16 %v582, %v575
      %v653 = vpack.c.b16 %v583, %v576
      %v654 = vpack.c.b16 %v591, %v584
      %v655 = vpack.c.b16 %v592, %v585
      %v656 = vpack.c.b16 %v593, %v586
      %v657 = vpack.c.b16 %v594, %v587
      %v658 = vpack.c.b16 %v595, %v588
      %v659 = vpack.c.b16 %v596, %v589
      %v660 = vpack.c.b16 %v597, %v590
      %v661 = vpack.c.b16 %v605, %v598
      %v662 = vpack.c.b16 %v606, %v599
      %v663 = vpack.c.b16 %v607, %v600
      %v664 = vpack.c.b16 %v608, %v601
      %v665 = vpack.c.b16 %v609, %v602
      %v666 = vpack.c.b16 %v610, %v603
      %v667 = vpack.c.b16 %v611, %v604
      %v844 = vunpack.c.l.b16 %v296
      %v845 = vunpack.c.h.b16 %v296
      %v846 = vunpack.c.l.b16 %v297
      %v847 = vunpack.c.h.b16 %v297
      %v848 = vunpack.c.l.b16 %v298
      %v849 = vunpack.c.h.b16 %v298
      %v850 = vunpack.c.l.b16 %v299
      %v851 = vunpack.c.l.b16 %v300
      %v852 = vunpack.c.h.b16 %v300
      %v853 = vunpack.c.l.b16 %v301
      %v854 = vunpack.c.h.b16 %v301
      %v855 = vunpack.c.l.b16 %v302
      %v856 = vunpack.c.h.b16 %v302
      %v857 = vunpack.c.l.b16 %v303
      %v858 = vunpack.c.l.b16 %v304
      %v859 = vunpack.c.h.b16 %v304
      %v860 = vunpack.c.l.b16 %v305
      %v861 = vunpack.c.h.b16 %v305
      %v862 = vunpack.c.l.b16 %v306
      %v863 = vunpack.c.h.b16 %v306
      %v864 = vunpack.c.l.b16 %v307
      %v865 = vunpack.c.l.b16 %v308
      %v866 = vunpack.c.h.b16 %v308
      %v867 = vunpack.c.l.b16 %v309
      %v868 = vunpack.c.h.b16 %v309
      %v869 = vunpack.c.l.b16 %v310
      %v870 = vunpack.c.h.b16 %v310
      %v871 = vunpack.c.l.b16 %v311
      %v872 = vunpack.c.l.b16 %v312
      %v873 = vunpack.c.h.b16 %v312
      %v874 = vunpack.c.l.b16 %v313
      %v875 = vunpack.c.h.b16 %v313
      %v876 = vunpack.c.l.b16 %v314
      %v877 = vunpack.c.h.b16 %v314
      %v878 = vunpack.c.l.b16 %v315
      %v879 = vunpack.c.l.b16 %v316
      %v880 = vunpack.c.h.b16 %v316
      %v881 = vunpack.c.l.b16 %v317
      %v882 = vunpack.c.h.b16 %v317
      %v883 = vunpack.c.l.b16 %v318
      %v884 = vunpack.c.h.b16 %v318
      %v885 = vunpack.c.l.b16 %v319
      %v886 = vunpack.c.l.b16 %v320
      %v887 = vunpack.c.h.b16 %v320
      %v888 = vunpack.c.l.b16 %v321
      %v889 = vunpack.c.h.b16 %v321
      %v890 = vunpack.c.l.b16 %v322
      %v891 = vunpack.c.h.b16 %v322
      %v892 = vunpack.c.l.b16 %v323
      %v893 = vunpack.c.l.b16 %v324
      %v894 = vunpack.c.h.b16 %v324
      %v895 = vunpack.c.l.b16 %v325
      %v896 = vunpack.c.h.b16 %v325
      %v897 = vunpack.c.l.b16 %v326
      %v898 = vunpack.c.h.b16 %v326
      %v899 = vunpack.c.l.b16 %v327
      %v900 = vunpack.c.l.b16 %v328
      %v901 = vunpack.c.h.b16 %v328
      %v902 = vunpack.c.l.b16 %v329
      %v903 = vunpack.c.h.b16 %v329
      %v904 = vunpack.c.l.b16 %v330
      %v905 = vunpack.c.h.b16 %v330
      %v906 = vunpack.c.l.b16 %v331
      %v907 = vunpack.c.l.b16 %v332
      %v908 = vunpack.c.h.b16 %v332
      %v909 = vunpack.c.l.b16 %v333
      %v910 = vunpack.c.h.b16 %v333
      %v911 = vunpack.c.l.b16 %v334
      %v912 = vunpack.c.h.b16 %v334
      %v913 = vunpack.c.l.b16 %v335
      %v914 = vunpack.c.l.b16 %v336
      %v915 = vunpack.c.h.b16 %v336
      %v916 = vunpack.c.l.b16 %v337
      %v917 = vunpack.c.h.b16 %v337
      %v918 = vunpack.c.l.b16 %v338
      %v919 = vunpack.c.h.b16 %v338
      %v920 = vunpack.c.l.b16 %v339
      %v921 = vunpack.c.l.b16 %v340
      %v922 = vunpack.c.h.b16 %v340
      %v923 = vunpack.c.l.b16 %v341
      %v924 = vunpack.c.h.b16 %v341
      %v925 = vunpack.c.l.b16 %v342
      %v926 = vunpack.c.h.b16 %v342
      %v927 = vunpack.c.l.b16 %v343
      %v928 = vunpack.c.l.b16 %v344
      %v929 = vunpack.c.h.b16 %v344
      %v930 = vunpack.c.l.b16 %v345
      %v931 = vunpack.c.h.b16 %v345
      %v932 = vunpack.c.l.b16 %v346
      %v933 = vunpack.c.h.b16 %v346
      %v934 = vunpack.c.l.b16 %v347
      %v935 = vunpack.c.l.b16 %v348
      %v936 = vunpack.c.h.b16 %v348
      %v937 = vunpack.c.l.b16 %v349
      %v938 = vunpack.c.h.b16 %v349
      %v939 = vunpack.c.l.b16 %v350
      %v940 = vunpack.c.h.b16 %v350
      %v941 = vunpack.c.l.b16 %v351
      %v942 = vunpack.c.l.b16 %v352
      %v943 = vunpack.c.h.b16 %v352
      %v944 = vunpack.c.l.b16 %v353
      %v945 = vunpack.c.h.b16 %v353
      %v946 = vunpack.c.l.b16 %v354
      %v947 = vunpack.c.h.b16 %v354
      %v948 = vunpack.c.l.b16 %v355
      %v949 = vunpack.c.l.b16 %v356
      %v950 = vunpack.c.h.b16 %v356
      %v951 = vunpack.c.l.b16 %v357
      %v952 = vunpack.c.h.b16 %v357
      %v953 = vunpack.c.l.b16 %v358
      %v954 = vunpack.c.h.b16 %v358
      %v955 = vunpack.c.l.b16 %v359
      %v956 = vunpack.c.l.b16 %v360
      %v957 = vunpack.c.h.b16 %v360
      %v958 = vunpack.c.l.b16 %v361
      %v959 = vunpack.c.h.b16 %v361
      %v960 = vunpack.c.l.b16 %v362
      %v961 = vunpack.c.h.b16 %v362
      %v962 = vunpack.c.l.b16 %v363
      %v963 = vunpack.c.l.b16 %v364
      %v964 = vunpack.c.h.b16 %v364
      %v965 = vunpack.c.l.b16 %v365
      %v966 = vunpack.c.h.b16 %v365
      %v967 = vunpack.c.l.b16 %v366
      %v968 = vunpack.c.h.b16 %v366
      %v969 = vunpack.c.l.b16 %v367
      %v970 = vunpack.c.l.b16 %v368
      %v971 = vunpack.c.h.b16 %v368
      %v972 = vunpack.c.l.b16 %v369
      %v973 = vunpack.c.h.b16 %v369
      %v974 = vunpack.c.l.b16 %v370
      %v975 = vunpack.c.h.b16 %v370
      %v976 = vunpack.c.l.b16 %v371
      %v977 = vunpack.c.l.b16 %v372
      %v978 = vunpack.c.h.b16 %v372
      %v979 = vunpack.c.l.b16 %v373
      %v980 = vunpack.c.h.b16 %v373
      %v981 = vunpack.c.l.b16 %v374
      %v982 = vunpack.c.h.b16 %v374
      %v983 = vunpack.c.l.b16 %v375
      %v984 = vunpack.c.l.b16 %v376
      %v985 = vunpack.c.h.b16 %v376
      %v986 = vunpack.c.l.b16 %v377
      %v987 = vunpack.c.h.b16 %v377
      %v988 = vunpack.c.l.b16 %v378
      %v989 = vunpack.c.h.b16 %v378
      %v990 = vunpack.c.l.b16 %v379
      %v991 = vunpack.c.l.b16 %v380
      %v992 = vunpack.c.h.b16 %v380
      %v993 = vunpack.c.l.b16 %v381
      %v994 = vunpack.c.h.b16 %v381
      %v995 = vunpack.c.l.b16 %v382
      %v996 = vunpack.c.h.b16 %v382
      %v997 = vunpack.c.l.b16 %v383
      %v998 = vunpack.c.l.b16 %v384
      %v999 = vunpack.c.h.b16 %v384
      %v1000 = vunpack.c.l.b16 %v385
      %v1001 = vunpack.c.h.b16 %v385
      %v1002 = vunpack.c.l.b16 %v386
      %v1003 = vunpack.c.h.b16 %v386
      %v1004 = vunpack.c.l.b16 %v387
      %v1005 = vunpack.c.l.b16 %v388
      %v1006 = vunpack.c.h.b16 %v388
      %v1007 = vunpack.c.l.b16 %v389
      %v1008 = vunpack.c.h.b16 %v389
      %v1009 = vunpack.c.l.b16 %v390
      %v1010 = vunpack.c.h.b16 %v390
      %v1011 = vunpack.c.l.b16 %v391
      %v1012 = vunpack.c.l.b16 %v392
      %v1013 = vunpack.c.h.b16 %v392
      %v1014 = vunpack.c.l.b16 %v393
      %v1015 = vunpack.c.h.b16 %v393
      %v1016 = vunpack.c.l.b16 %v394
      %v1017 = vunpack.c.h.b16 %v394
      %v1018 = vunpack.c.l.b16 %v395
      %v1019 = vunpack.c.l.b16 %v396
      %v1020 = vunpack.c.h.b16 %v396
      %v1021 = vunpack.c.l.b16 %v397
      %v1022 = vunpack.c.h.b16 %v397
      %v1023 = vunpack.c.l.b16 %v398
      %v1024 = vunpack.c.h.b16 %v398
      %v1025 = vunpack.c.l.b16 %v399
      %v1026 = vunpack.c.l.b16 %v400
      %v1027 = vunpack.c.h.b16 %v400
      %v1028 = vunpack.c.l.b16 %v401
      %v1029 = vunpack.c.h.b16 %v401
      %v1030 = vunpack.c.l.b16 %v402
      %v1031 = vunpack.c.h.b16 %v402
      %v1032 = vunpack.c.l.b16 %v403
      %v1033 = vunpack.c.l.b16 %v404
      %v1034 = vunpack.c.h.b16 %v404
      %v1035 = vunpack.c.l.b16 %v405
      %v1036 = vunpack.c.h.b16 %v405
      %v1037 = vunpack.c.l.b16 %v406
      %v1038 = vunpack.c.h.b16 %v406
      %v1039 = vunpack.c.l.b16 %v407
      %v1040 = vunpack.c.l.b16 %v408
      %v1041 = vunpack.c.h.b16 %v408
      %v1042 = vunpack.c.l.b16 %v409
      %v1043 = vunpack.c.h.b16 %v409
      %v1044 = vunpack.c.l.b16 %v410
      %v1045 = vunpack.c.h.b16 %v410
      %v1046 = vunpack.c.l.b16 %v411
      %v1047 = vunpack.c.l.b16 %v412
      %v1048 = vunpack.c.h.b16 %v412
      %v1049 = vunpack.c.l.b16 %v413
      %v1050 = vunpack.c.h.b16 %v413
      %v1051 = vunpack.c.l.b16 %v414
      %v1052 = vunpack.c.h.b16 %v414
      %v1053 = vunpack.c.l.b16 %v415
      %v1054 = vunpack.c.l.b16 %v416
      %v1055 = vunpack.c.h.b16 %v416
      %v1056 = vunpack.c.l.b16 %v417
      %v1057 = vunpack.c.h.b16 %v417
      %v1058 = vunpack.c.l.b16 %v418
      %v1059 = vunpack.c.h.b16 %v418
      %v1060 = vunpack.c.l.b16 %v419
      %v1061 = vunpack.c.l.b16 %v420
      %v1062 = vunpack.c.h.b16 %v420
      %v1063 = vunpack.c.l.b16 %v421
      %v1064 = vunpack.c.h.b16 %v421
      %v1065 = vunpack.c.l.b16 %v422
      %v1066 = vunpack.c.h.b16 %v422
      %v1067 = vunpack.c.l.b16 %v423
      %v1068 = vpack.c.b16 %v851, %v844
      %v1069 = vpack.c.b16 %v852, %v845
      %v1070 = vpack.c.b16 %v853, %v846
      %v1071 = vpack.c.b16 %v854, %v847
      %v1072 = vpack.c.b16 %v855, %v848
      %v1073 = vpack.c.b16 %v856, %v849
      %v1074 = vpack.c.b16 %v857, %v850
      %v1075 = vpack.c.b16 %v865, %v858
      %v1076 = vpack.c.b16 %v866, %v859
      %v1077 = vpack.c.b16 %v867, %v860
      %v1078 = vpack.c.b16 %v868, %v861
      %v1079 = vpack.c.b16 %v869, %v862
      %v1080 = vpack.c.b16 %v870, %v863
      %v1081 = vpack.c.b16 %v871, %v864
      %v1082 = vpack.c.b16 %v879, %v872
      %v1083 = vpack.c.b16 %v880, %v873
      %v1084 = vpack.c.b16 %v881, %v874
      %v1085 = vpack.c.b16 %v882, %v875
      %v1086 = vpack.c.b16 %v883, %v876
      %v1087 = vpack.c.b16 %v884, %v877
      %v1088 = vpack.c.b16 %v885, %v878
      %v1089 = vpack.c.b16 %v893, %v886
      %v1090 = vpack.c.b16 %v894, %v887
      %v1091 = vpack.c.b16 %v895, %v888
      %v1092 = vpack.c.b16 %v896, %v889
      %v1093 = vpack.c.b16 %v897, %v890
      %v1094 = vpack.c.b16 %v898, %v891
      %v1095 = vpack.c.b16 %v899, %v892
      %v1096 = vpack.c.b16 %v907, %v900
      %v1097 = vpack.c.b16 %v908, %v901
      %v1098 = vpack.c.b16 %v909, %v902
      %v1099 = vpack.c.b16 %v910, %v903
      %v1100 = vpack.c.b16 %v911, %v904
      %v1101 = vpack.c.b16 %v912, %v905
      %v1102 = vpack.c.b16 %v913, %v906
      %v1103 = vpack.c.b16 %v921, %v914
      %v1104 = vpack.c.b16 %v922, %v915
      %v1105 = vpack.c.b16 %v923, %v916
      %v1106 = vpack.c.b16 %v924, %v917
      %v1107 = vpack.c.b16 %v925, %v918
      %v1108 = vpack.c.b16 %v926, %v919
      %v1109 = vpack.c.b16 %v927, %v920
      %v1110 = vpack.c.b16 %v935, %v928
      %v1111 = vpack.c.b16 %v936, %v929
      %v1112 = vpack.c.b16 %v937, %v930
      %v1113 = vpack.c.b16 %v938, %v931
      %v1114 = vpack.c.b16 %v939, %v932
      %v1115 = vpack.c.b16 %v940, %v933
      %v1116 = vpack.c.b16 %v941, %v934
      %v1117 = vpack.c.b16 %v949, %v942
      %v1118 = vpack.c.b16 %v950, %v943
      %v1119 = vpack.c.b16 %v951, %v944
      %v1120 = vpack.c.b16 %v952, %v945
      %v1121 = vpack.c.b16 %v953, %v946
      %v1122 = vpack.c.b16 %v954, %v947
      %v1123 = vpack.c.b16 %v955, %v948
      %v1124 = vpack.c.b16 %v963, %v956
      %v1125 = vpack.c.b16 %v964, %v957
      %v1126 = vpack.c.b16 %v965, %v958
      %v1127 = vpack.c.b16 %v966, %v959
      %v1128 = vpack.c.b16 %v967, %v960
      %v1129 = vpack.c.b16 %v968, %v961
      %v1130 = vpack.c.b16 %v969, %v962
      %v1131 = vpack.c.b16 %v977, %v970
      %v1132 = vpack.c.b16 %v978, %v971
      %v1133 = vpack.c.b16 %v979, %v972
      %v1134 = vpack.c.b16 %v980, %v973
      %v1135 = vpack.c.b16 %v981, %v974
      %v1136 = vpack.c.b16 %v982, %v975
      %v1137 = vpack.c.b16 %v983, %v976
      %v1138 = vpack.c.b16 %v991, %v984
      %v1139 = vpack.c.b16 %v992, %v985
      %v1140 = vpack.c.b16 %v993, %v986
      %v1141 = vpack.c.b16 %v994, %v987
      %v1142 = vpack.c.b16 %v995, %v988
      %v1143 = vpack.c.b16 %v996, %v989
      %v1144 = vpack.c.b16 %v997, %v990
      %v1145 = vpack.c.b16 %v1005, %v998
      %v1146 = vpack.c.b16 %v1006, %v999
      %v1147 = vpack.c.b16 %v1007, %v1000
      %v1148 = vpack.c.b16 %v1008, %v1001
      %v1149 = vpack.c.b16 %v1009, %v1002
      %v1150 = vpack.c.b16 %v1010, %v1003
      %v1151 = vpack.c.b16 %v1011, %v1004
      %v1152 = vpack.c.b16 %v1019, %v1012
      %v1153 = vpack.c.b16 %v1020, %v1013
      %v1154 = vpack.c.b16 %v1021, %v1014
      %v1155 = vpack.c.b16 %v1022, %v1015
      %v1156 = vpack.c.b16 %v1023, %v1016
      %v1157 = vpack.c.b16 %v1024, %v1017
      %v1158 = vpack.c.b16 %v1025, %v1018
      %v1159 = vpack.c.b16 %v1033, %v1026
      %v1160 = vpack.c.b16 %v1034, %v1027
      %v1161 = vpack.c.b16 %v1035, %v1028
      %v1162 = vpack.c.b16 %v1036, %v1029
      %v1163 = vpack.c.b16 %v1037, %v1030
      %v1164 = vpack.c.b16 %v1038, %v1031
      %v1165 = vpack.c.b16 %v1039, %v1032
      %v1166 = vpack.c.b16 %v1047, %v1040
      %v1167 = vpack.c.b16 %v1048, %v1041
      %v1168 = vpack.c.b16 %v1049, %v1042
      %v1169 = vpack.c.b16 %v1050, %v1043
      %v1170 = vpack.c.b16 %v1051, %v1044
      %v1171 = vpack.c.b16 %v1052, %v1045
      %v1172 = vpack.c.b16 %v1053, %v1046
      %v1173 = vpack.c.b16 %v1061, %v1054
      %v1174 = vpack.c.b16 %v1062, %v1055
      %v1175 = vpack.c.b16 %v1063, %v1056
      %v1176 = vpack.c.b16 %v1064, %v1057
      %v1177 = vpack.c.b16 %v1065, %v1058
      %v1178 = vpack.c.b16 %v1066, %v1059
      %v1179 = vpack.c.b16 %v1067, %v1060
      %vm1276 = vcmask 130048
      %v1278 = vsel %vm1276, %v618, 0
      %v1281 = vsel %vm1276, %v625, 0
      %v1284 = vsel %vm1276, %v632, 0
      %v1287 = vsel %vm1276, %v639, 0
      %v1290 = vsel %vm1276, %v646, 0
      %v1293 = vsel %vm1276, %v653, 0
      %v1296 = vsel %vm1276, %v660, 0
      %v1299 = vsel %vm1276, %v667, 0
      %v1302 = vsel %vm1276, %v1074, 0
      %v1305 = vsel %vm1276, %v1081, 0
      %v1308 = vsel %vm1276, %v1088, 0
      %v1311 = vsel %vm1276, %v1095, 0
      %v1314 = vsel %vm1276, %v1102, 0
      %v1317 = vsel %vm1276, %v1109, 0
      %v1320 = vsel %vm1276, %v1116, 0
      %v1323 = vsel %vm1276, %v1123, 0
      %v1326 = vsel %vm1276, %v1130, 0
      %v1329 = vsel %vm1276, %v1137, 0
      %v1332 = vsel %vm1276, %v1144, 0
      %v1335 = vsel %vm1276, %v1151, 0
      %v1338 = vsel %vm1276, %v1158, 0
      %v1341 = vsel %vm1276, %v1165, 0
      %v1344 = vsel %vm1276, %v1172, 0
      %v1347 = vsel %vm1276, %v1179, 0
      %1349 = vmatprep.subr.bf16.mxu0 %v1118
      %1350 = vmatpush1.bf16.xpose.msra.mxu0 %v1117
      %1351 = vmatprep.subr.bf16.mxu0 %v1111
      %1352 = vmatpush1.bf16.xpose.msra.mxu0 %v1110
      %1353 = vmatprep.subr.bf16.mxu0 %v1104
      %1354 = vmatpush1.bf16.xpose.msra.mxu0 %v1103
      %1355 = vmatprep.subr.bf16.mxu0 %v1097
      %1356 = vmatpush1.bf16.xpose.msra.mxu0 %v1096
      %1357 = vmatprep.subr.bf16.mxu0 %v1090
      %1358 = vmatpush1.bf16.xpose.msra.mxu0 %v1089
      %1359 = vmatprep.subr.bf16.mxu0 %v1083
      %1360 = vmatpush1.bf16.xpose.msra.mxu0 %v1082
      %1361 = vmatprep.subr.bf16.mxu0 %v1076
      %1362 = vmatpush1.bf16.xpose.msra.mxu0 %v1075
      %1363 = vmatprep.subr.bf16.mxu0 %v1069
      %1364 = vmatpush1.bf16.xpose.msra.mxu0 %v1068
      %1365 = vmatprep.subr.bf16.mxu0 %v1174
      %1366 = vmatpush2.bf16.xpose.msra.mxu0 %v1173
      %1367 = vmatprep.subr.bf16.mxu0 %v1167
      %1368 = vmatpush2.bf16.xpose.msra.mxu0 %v1166
      %1369 = vmatprep.subr.bf16.mxu0 %v1160
      %1370 = vmatpush2.bf16.xpose.msra.mxu0 %v1159
      %1371 = vmatprep.subr.bf16.mxu0 %v1153
      %1372 = vmatpush2.bf16.xpose.msra.mxu0 %v1152
      %1373 = vmatprep.subr.bf16.mxu0 %v1146
      %1374 = vmatpush2.bf16.xpose.msra.mxu0 %v1145
      %1375 = vmatprep.subr.bf16.mxu0 %v1139
      %1376 = vmatpush2.bf16.xpose.msra.mxu0 %v1138
      %1377 = vmatprep.subr.bf16.mxu0 %v1132
      %1378 = vmatpush2.bf16.xpose.msra.mxu0 %v1131
      %1379 = vmatprep.subr.bf16.mxu0 %v1125
      %1380 = vmatpush2.bf16.xpose.msra.mxu0 %v1124
      %1381 = vmatprep.mubr.bf16.mxu0 %v613
      %1382 = vmatmul.mubr.bf16.gmra.mxu0 %v612
      %v1383 = vpop.f32.mrf.mxu0
      %v1384 = vadd.f32 %v429, %v1383
      %v1385 = vpop.f32.mrf.mxu0
      %v1386 = vadd.f32 %v433, %v1385
      %v1387 = vpop.f32.mrf.mxu0
      %v1388 = vadd.f32 %v429, %v1387
      %v1389 = vpop.f32.mrf.mxu0
      %v1390 = vadd.f32 %v433, %v1389
      %1391 = vmatprep.mubr.bf16.mxu0 %v620
      %1392 = vmatmul.mubr.bf16.gmra.mxu0 %v619
      %v1393 = vpop.f32.mrf.mxu0
      %v1394 = vadd.f32 %v429, %v1393
      %v1395 = vpop.f32.mrf.mxu0
      %v1396 = vadd.f32 %v433, %v1395
      %v1397 = vpop.f32.mrf.mxu0
      %v1398 = vadd.f32 %v429, %v1397
      %v1399 = vpop.f32.mrf.mxu0
      %v1400 = vadd.f32 %v433, %v1399
      %1401 = vmatprep.mubr.bf16.mxu0 %v627
      %1402 = vmatmul.mubr.bf16.gmra.mxu0 %v626
      %v1403 = vpop.f32.mrf.mxu0
      %v1404 = vadd.f32 %v429, %v1403
      %v1405 = vpop.f32.mrf.mxu0
      %v1406 = vadd.f32 %v433, %v1405
      %v1407 = vpop.f32.mrf.mxu0
      %v1408 = vadd.f32 %v429, %v1407
      %v1409 = vpop.f32.mrf.mxu0
      %v1410 = vadd.f32 %v433, %v1409
      %1411 = vmatprep.mubr.bf16.mxu0 %v634
      %1412 = vmatmul.mubr.bf16.gmra.mxu0 %v633
      %v1413 = vpop.f32.mrf.mxu0
      %v1414 = vadd.f32 %v429, %v1413
      %v1415 = vpop.f32.mrf.mxu0
      %v1416 = vadd.f32 %v433, %v1415
      %v1417 = vpop.f32.mrf.mxu0
      %v1418 = vadd.f32 %v429, %v1417
      %v1419 = vpop.f32.mrf.mxu0
      %v1420 = vadd.f32 %v433, %v1419
      %1421 = vmatprep.mubr.bf16.mxu0 %v641
      %1422 = vmatmul.mubr.bf16.gmra.mxu0 %v640
      %v1423 = vpop.f32.mrf.mxu0
      %v1424 = vadd.f32 %v429, %v1423
      %v1425 = vpop.f32.mrf.mxu0
      %v1426 = vadd.f32 %v433, %v1425
      %v1427 = vpop.f32.mrf.mxu0
      %v1428 = vadd.f32 %v429, %v1427
      %v1429 = vpop.f32.mrf.mxu0
      %v1430 = vadd.f32 %v433, %v1429
      %1431 = vmatprep.mubr.bf16.mxu0 %v648
      %1432 = vmatmul.mubr.bf16.gmra.mxu0 %v647
      %v1433 = vpop.f32.mrf.mxu0
      %v1434 = vadd.f32 %v429, %v1433
      %v1435 = vpop.f32.mrf.mxu0
      %v1436 = vadd.f32 %v433, %v1435
      %v1437 = vpop.f32.mrf.mxu0
      %v1438 = vadd.f32 %v429, %v1437
      %v1439 = vpop.f32.mrf.mxu0
      %v1440 = vadd.f32 %v433, %v1439
      %1441 = vmatprep.mubr.bf16.mxu0 %v655
      %1442 = vmatmul.mubr.bf16.gmra.mxu0 %v654
      %v1443 = vpop.f32.mrf.mxu0
      %v1444 = vadd.f32 %v429, %v1443
      %v1445 = vpop.f32.mrf.mxu0
      %v1446 = vadd.f32 %v433, %v1445
      %v1447 = vpop.f32.mrf.mxu0
      %v1448 = vadd.f32 %v429, %v1447
      %v1449 = vpop.f32.mrf.mxu0
      %v1450 = vadd.f32 %v433, %v1449
      %1451 = vmatprep.mubr.bf16.mxu0 %v662
      %1452 = vmatmul.mubr.bf16.gmra.mxu0 %v661
      %v1453 = vpop.f32.mrf.mxu0
      %v1454 = vadd.f32 %v429, %v1453
      %v1455 = vpop.f32.mrf.mxu0
      %v1456 = vadd.f32 %v433, %v1455
      %v1457 = vpop.f32.mrf.mxu0
      %v1458 = vadd.f32 %v429, %v1457
      %v1459 = vpop.f32.mrf.mxu0
      %v1460 = vadd.f32 %v433, %v1459
      %1461 = vdwg.mxu0
      %1462 = vmatprep.subr.bf16.mxu0 %v1120
      %1463 = vmatpush1.bf16.xpose.msra.mxu0 %v1119
      %1464 = vmatprep.subr.bf16.mxu0 %v1113
      %1465 = vmatpush1.bf16.xpose.msra.mxu0 %v1112
      %1466 = vmatprep.subr.bf16.mxu0 %v1106
      %1467 = vmatpush1.bf16.xpose.msra.mxu0 %v1105
      %1468 = vmatprep.subr.bf16.mxu0 %v1099
      %1469 = vmatpush1.bf16.xpose.msra.mxu0 %v1098
      %1470 = vmatprep.subr.bf16.mxu0 %v1092
      %1471 = vmatpush1.bf16.xpose.msra.mxu0 %v1091
      %1472 = vmatprep.subr.bf16.mxu0 %v1085
      %1473 = vmatpush1.bf16.xpose.msra.mxu0 %v1084
      %1474 = vmatprep.subr.bf16.mxu0 %v1078
      %1475 = vmatpush1.bf16.xpose.msra.mxu0 %v1077
      %1476 = vmatprep.subr.bf16.mxu0 %v1071
      %1477 = vmatpush1.bf16.xpose.msra.mxu0 %v1070
      %1478 = vmatprep.subr.bf16.mxu0 %v1176
      %1479 = vmatpush2.bf16.xpose.msra.mxu0 %v1175
      %1480 = vmatprep.subr.bf16.mxu0 %v1169
      %1481 = vmatpush2.bf16.xpose.msra.mxu0 %v1168
      %1482 = vmatprep.subr.bf16.mxu0 %v1162
      %1483 = vmatpush2.bf16.xpose.msra.mxu0 %v1161
      %1484 = vmatprep.subr.bf16.mxu0 %v1155
      %1485 = vmatpush2.bf16.xpose.msra.mxu0 %v1154
      %1486 = vmatprep.subr.bf16.mxu0 %v1148
      %1487 = vmatpush2.bf16.xpose.msra.mxu0 %v1147
      %1488 = vmatprep.subr.bf16.mxu0 %v1141
      %1489 = vmatpush2.bf16.xpose.msra.mxu0 %v1140
      %1490 = vmatprep.subr.bf16.mxu0 %v1134
      %1491 = vmatpush2.bf16.xpose.msra.mxu0 %v1133
      %1492 = vmatprep.subr.bf16.mxu0 %v1127
      %1493 = vmatpush2.bf16.xpose.msra.mxu0 %v1126
      %1494 = vmatprep.mubr.bf16.mxu0 %v615
      %1495 = vmatmul.mubr.bf16.gmra.mxu0 %v614
      %v1496 = vpop.f32.mrf.mxu0
      %v1497 = vadd.f32 %v1384, %v1496
      %v1498 = vpop.f32.mrf.mxu0
      %v1499 = vadd.f32 %v1386, %v1498
      %v1500 = vpop.f32.mrf.mxu0
      %v1501 = vadd.f32 %v1388, %v1500
      %v1502 = vpop.f32.mrf.mxu0
      %v1503 = vadd.f32 %v1390, %v1502
      %1504 = vmatprep.mubr.bf16.mxu0 %v622
      %1505 = vmatmul.mubr.bf16.gmra.mxu0 %v621
      %v1506 = vpop.f32.mrf.mxu0
      %v1507 = vadd.f32 %v1394, %v1506
      %v1508 = vpop.f32.mrf.mxu0
      %v1509 = vadd.f32 %v1396, %v1508
      %v1510 = vpop.f32.mrf.mxu0
      %v1511 = vadd.f32 %v1398, %v1510
      %v1512 = vpop.f32.mrf.mxu0
      %v1513 = vadd.f32 %v1400, %v1512
      %1514 = vmatprep.mubr.bf16.mxu0 %v629
      %1515 = vmatmul.mubr.bf16.gmra.mxu0 %v628
      %v1516 = vpop.f32.mrf.mxu0
      %v1517 = vadd.f32 %v1404, %v1516
      %v1518 = vpop.f32.mrf.mxu0
      %v1519 = vadd.f32 %v1406, %v1518
      %v1520 = vpop.f32.mrf.mxu0
      %v1521 = vadd.f32 %v1408, %v1520
      %v1522 = vpop.f32.mrf.mxu0
      %v1523 = vadd.f32 %v1410, %v1522
      %1524 = vmatprep.mubr.bf16.mxu0 %v636
      %1525 = vmatmul.mubr.bf16.gmra.mxu0 %v635
      %v1526 = vpop.f32.mrf.mxu0
      %v1527 = vadd.f32 %v1414, %v1526
      %v1528 = vpop.f32.mrf.mxu0
      %v1529 = vadd.f32 %v1416, %v1528
      %v1530 = vpop.f32.mrf.mxu0
      %v1531 = vadd.f32 %v1418, %v1530
      %v1532 = vpop.f32.mrf.mxu0
      %v1533 = vadd.f32 %v1420, %v1532
      %1534 = vmatprep.mubr.bf16.mxu0 %v643
      %1535 = vmatmul.mubr.bf16.gmra.mxu0 %v642
      %v1536 = vpop.f32.mrf.mxu0
      %v1537 = vadd.f32 %v1424, %v1536
      %v1538 = vpop.f32.mrf.mxu0
      %v1539 = vadd.f32 %v1426, %v1538
      %v1540 = vpop.f32.mrf.mxu0
      %v1541 = vadd.f32 %v1428, %v1540
      %v1542 = vpop.f32.mrf.mxu0
      %v1543 = vadd.f32 %v1430, %v1542
      %1544 = vmatprep.mubr.bf16.mxu0 %v650
      %1545 = vmatmul.mubr.bf16.gmra.mxu0 %v649
      %v1546 = vpop.f32.mrf.mxu0
      %v1547 = vadd.f32 %v1434, %v1546
      %v1548 = vpop.f32.mrf.mxu0
      %v1549 = vadd.f32 %v1436, %v1548
      %v1550 = vpop.f32.mrf.mxu0
      %v1551 = vadd.f32 %v1438, %v1550
      %v1552 = vpop.f32.mrf.mxu0
      %v1553 = vadd.f32 %v1440, %v1552
      %1554 = vmatprep.mubr.bf16.mxu0 %v657
      %1555 = vmatmul.mubr.bf16.gmra.mxu0 %v656
      %v1556 = vpop.f32.mrf.mxu0
      %v1557 = vadd.f32 %v1444, %v1556
      %v1558 = vpop.f32.mrf.mxu0
      %v1559 = vadd.f32 %v1446, %v1558
      %v1560 = vpop.f32.mrf.mxu0
      %v1561 = vadd.f32 %v1448, %v1560
      %v1562 = vpop.f32.mrf.mxu0
      %v1563 = vadd.f32 %v1450, %v1562
      %1564 = vmatprep.mubr.bf16.mxu0 %v664
      %1565 = vmatmul.mubr.bf16.gmra.mxu0 %v663
      %v1566 = vpop.f32.mrf.mxu0
      %v1567 = vadd.f32 %v1454, %v1566
      %v1568 = vpop.f32.mrf.mxu0
      %v1569 = vadd.f32 %v1456, %v1568
      %v1570 = vpop.f32.mrf.mxu0
      %v1571 = vadd.f32 %v1458, %v1570
      %v1572 = vpop.f32.mrf.mxu0
      %v1573 = vadd.f32 %v1460, %v1572
      %1574 = vdwg.mxu0
      %1575 = vmatprep.subr.bf16.mxu0 %v1122
      %1576 = vmatpush1.bf16.xpose.msra.mxu0 %v1121
      %1577 = vmatprep.subr.bf16.mxu0 %v1115
      %1578 = vmatpush1.bf16.xpose.msra.mxu0 %v1114
      %1579 = vmatprep.subr.bf16.mxu0 %v1108
      %1580 = vmatpush1.bf16.xpose.msra.mxu0 %v1107
      %1581 = vmatprep.subr.bf16.mxu0 %v1101
      %1582 = vmatpush1.bf16.xpose.msra.mxu0 %v1100
      %1583 = vmatprep.subr.bf16.mxu0 %v1094
      %1584 = vmatpush1.bf16.xpose.msra.mxu0 %v1093
      %1585 = vmatprep.subr.bf16.mxu0 %v1087
      %1586 = vmatpush1.bf16.xpose.msra.mxu0 %v1086
      %1587 = vmatprep.subr.bf16.mxu0 %v1080
      %1588 = vmatpush1.bf16.xpose.msra.mxu0 %v1079
      %1589 = vmatprep.subr.bf16.mxu0 %v1073
      %1590 = vmatpush1.bf16.xpose.msra.mxu0 %v1072
      %1591 = vmatprep.subr.bf16.mxu0 %v1178
      %1592 = vmatpush2.bf16.xpose.msra.mxu0 %v1177
      %1593 = vmatprep.subr.bf16.mxu0 %v1171
      %1594 = vmatpush2.bf16.xpose.msra.mxu0 %v1170
      %1595 = vmatprep.subr.bf16.mxu0 %v1164
      %1596 = vmatpush2.bf16.xpose.msra.mxu0 %v1163
      %1597 = vmatprep.subr.bf16.mxu0 %v1157
      %1598 = vmatpush2.bf16.xpose.msra.mxu0 %v1156
      %1599 = vmatprep.subr.bf16.mxu0 %v1150
      %1600 = vmatpush2.bf16.xpose.msra.mxu0 %v1149
      %1601 = vmatprep.subr.bf16.mxu0 %v1143
      %1602 = vmatpush2.bf16.xpose.msra.mxu0 %v1142
      %1603 = vmatprep.subr.bf16.mxu0 %v1136
      %1604 = vmatpush2.bf16.xpose.msra.mxu0 %v1135
      %1605 = vmatprep.subr.bf16.mxu0 %v1129
      %1606 = vmatpush2.bf16.xpose.msra.mxu0 %v1128
      %1607 = vmatprep.mubr.bf16.mxu0 %v617
      %1608 = vmatmul.mubr.bf16.gmra.mxu0 %v616
      %v1609 = vpop.f32.mrf.mxu0
      %v1610 = vadd.f32 %v1497, %v1609
      %v1611 = vpop.f32.mrf.mxu0
      %v1612 = vadd.f32 %v1499, %v1611
      %v1613 = vpop.f32.mrf.mxu0
      %v1614 = vadd.f32 %v1501, %v1613
      %v1615 = vpop.f32.mrf.mxu0
      %v1616 = vadd.f32 %v1503, %v1615
      %1617 = vmatprep.mubr.bf16.mxu0 %v624
      %1618 = vmatmul.mubr.bf16.gmra.mxu0 %v623
      %v1619 = vpop.f32.mrf.mxu0
      %v1620 = vadd.f32 %v1507, %v1619
      %v1621 = vpop.f32.mrf.mxu0
      %v1622 = vadd.f32 %v1509, %v1621
      %v1623 = vpop.f32.mrf.mxu0
      %v1624 = vadd.f32 %v1511, %v1623
      %v1625 = vpop.f32.mrf.mxu0
      %v1626 = vadd.f32 %v1513, %v1625
      %1627 = vmatprep.mubr.bf16.mxu0 %v631
      %1628 = vmatmul.mubr.bf16.gmra.mxu0 %v630
      %v1629 = vpop.f32.mrf.mxu0
      %v1630 = vadd.f32 %v1517, %v1629
      %v1631 = vpop.f32.mrf.mxu0
      %v1632 = vadd.f32 %v1519, %v1631
      %v1633 = vpop.f32.mrf.mxu0
      %v1634 = vadd.f32 %v1521, %v1633
      %v1635 = vpop.f32.mrf.mxu0
      %v1636 = vadd.f32 %v1523, %v1635
      %1637 = vmatprep.mubr.bf16.mxu0 %v638
      %1638 = vmatmul.mubr.bf16.gmra.mxu0 %v637
      %v1639 = vpop.f32.mrf.mxu0
      %v1640 = vadd.f32 %v1527, %v1639
      %v1641 = vpop.f32.mrf.mxu0
      %v1642 = vadd.f32 %v1529, %v1641
      %v1643 = vpop.f32.mrf.mxu0
      %v1644 = vadd.f32 %v1531, %v1643
      %v1645 = vpop.f32.mrf.mxu0
      %v1646 = vadd.f32 %v1533, %v1645
      %1647 = vmatprep.mubr.bf16.mxu0 %v645
      %1648 = vmatmul.mubr.bf16.gmra.mxu0 %v644
      %v1649 = vpop.f32.mrf.mxu0
      %v1650 = vadd.f32 %v1537, %v1649
      %v1651 = vpop.f32.mrf.mxu0
      %v1652 = vadd.f32 %v1539, %v1651
      %v1653 = vpop.f32.mrf.mxu0
      %v1654 = vadd.f32 %v1541, %v1653
      %v1655 = vpop.f32.mrf.mxu0
      %v1656 = vadd.f32 %v1543, %v1655
      %1657 = vmatprep.mubr.bf16.mxu0 %v652
      %1658 = vmatmul.mubr.bf16.gmra.mxu0 %v651
      %v1659 = vpop.f32.mrf.mxu0
      %v1660 = vadd.f32 %v1547, %v1659
      %v1661 = vpop.f32.mrf.mxu0
      %v1662 = vadd.f32 %v1549, %v1661
      %v1663 = vpop.f32.mrf.mxu0
      %v1664 = vadd.f32 %v1551, %v1663
      %v1665 = vpop.f32.mrf.mxu0
      %v1666 = vadd.f32 %v1553, %v1665
      %1667 = vmatprep.mubr.bf16.mxu0 %v659
      %1668 = vmatmul.mubr.bf16.gmra.mxu0 %v658
      %v1669 = vpop.f32.mrf.mxu0
      %v1670 = vadd.f32 %v1557, %v1669
      %v1671 = vpop.f32.mrf.mxu0
      %v1672 = vadd.f32 %v1559, %v1671
      %v1673 = vpop.f32.mrf.mxu0
      %v1674 = vadd.f32 %v1561, %v1673
      %v1675 = vpop.f32.mrf.mxu0
      %v1676 = vadd.f32 %v1563, %v1675
      %1677 = vmatprep.mubr.bf16.mxu0 %v666
      %1678 = vmatmul.mubr.bf16.gmra.mxu0 %v665
      %v1679 = vpop.f32.mrf.mxu0
      %v1680 = vadd.f32 %v1567, %v1679
      %v1681 = vpop.f32.mrf.mxu0
      %v1682 = vadd.f32 %v1569, %v1681
      %v1683 = vpop.f32.mrf.mxu0
      %v1684 = vadd.f32 %v1571, %v1683
      %v1685 = vpop.f32.mrf.mxu0
      %v1686 = vadd.f32 %v1573, %v1685
      %1687 = vdwg.mxu0
      %1688 = vmatprep.subr.bf16.mxu0 0
      %1689 = vmatpush1.bf16.xpose.msra.mxu0 %v1323
      %1690 = vmatprep.subr.bf16.mxu0 0
      %1691 = vmatpush1.bf16.xpose.msra.mxu0 %v1320
      %1692 = vmatprep.subr.bf16.mxu0 0
      %1693 = vmatpush1.bf16.xpose.msra.mxu0 %v1317
      %1694 = vmatprep.subr.bf16.mxu0 0
      %1695 = vmatpush1.bf16.xpose.msra.mxu0 %v1314
      %1696 = vmatprep.subr.bf16.mxu0 0
      %1697 = vmatpush1.bf16.xpose.msra.mxu0 %v1311
      %1698 = vmatprep.subr.bf16.mxu0 0
      %1699 = vmatpush1.bf16.xpose.msra.mxu0 %v1308
      %1700 = vmatprep.subr.bf16.mxu0 0
      %1701 = vmatpush1.bf16.xpose.msra.mxu0 %v1305
      %1702 = vmatprep.subr.bf16.mxu0 0
      %1703 = vmatpush1.bf16.xpose.msra.mxu0 %v1302
      %1704 = vmatprep.subr.bf16.mxu0 0
      %1705 = vmatpush2.bf16.xpose.msra.mxu0 %v1347
      %1706 = vmatprep.subr.bf16.mxu0 0
      %1707 = vmatpush2.bf16.xpose.msra.mxu0 %v1344
      %1708 = vmatprep.subr.bf16.mxu0 0
      %1709 = vmatpush2.bf16.xpose.msra.mxu0 %v1341
      %1710 = vmatprep.subr.bf16.mxu0 0
      %1711 = vmatpush2.bf16.xpose.msra.mxu0 %v1338
      %1712 = vmatprep.subr.bf16.mxu0 0
      %1713 = vmatpush2.bf16.xpose.msra.mxu0 %v1335
      %1714 = vmatprep.subr.bf16.mxu0 0
      %1715 = vmatpush2.bf16.xpose.msra.mxu0 %v1332
      %1716 = vmatprep.subr.bf16.mxu0 0
      %1717 = vmatpush2.bf16.xpose.msra.mxu0 %v1329
      %1718 = vmatprep.subr.bf16.mxu0 0
      %1719 = vmatpush2.bf16.xpose.msra.mxu0 %v1326
      %1720 = vmatprep.mubr.bf16.mxu0 0
      %1721 = vmatmul.mubr.bf16.gmra.mxu0 %v1278
      %v1722 = vpop.f32.mrf.mxu0
      %v1723 = vadd.f32 %v1610, %v1722
      %v1724 = vpop.f32.mrf.mxu0
      %v1725 = vadd.f32 %v1612, %v1724
      %v1726 = vpop.f32.mrf.mxu0
      %v1727 = vadd.f32 %v1614, %v1726
      %v1728 = vpop.f32.mrf.mxu0
      %v1729 = vadd.f32 %v1616, %v1728
      %1730 = vmatprep.mubr.bf16.mxu0 0
      %1731 = vmatmul.mubr.bf16.gmra.mxu0 %v1281
      %v1732 = vpop.f32.mrf.mxu0
      %v1733 = vadd.f32 %v1620, %v1732
      %v1734 = vpop.f32.mrf.mxu0
      %v1735 = vadd.f32 %v1622, %v1734
      %v1736 = vpop.f32.mrf.mxu0
      %v1737 = vadd.f32 %v1624, %v1736
      %v1738 = vpop.f32.mrf.mxu0
      %v1739 = vadd.f32 %v1626, %v1738
      %1740 = vmatprep.mubr.bf16.mxu0 0
      %1741 = vmatmul.mubr.bf16.gmra.mxu0 %v1284
      %v1742 = vpop.f32.mrf.mxu0
      %v1743 = vadd.f32 %v1630, %v1742
      %v1744 = vpop.f32.mrf.mxu0
      %v1745 = vadd.f32 %v1632, %v1744
      %v1746 = vpop.f32.mrf.mxu0
      %v1747 = vadd.f32 %v1634, %v1746
      %v1748 = vpop.f32.mrf.mxu0
      %v1749 = vadd.f32 %v1636, %v1748
      %1750 = vmatprep.mubr.bf16.mxu0 0
      %1751 = vmatmul.mubr.bf16.gmra.mxu0 %v1287
      %v1752 = vpop.f32.mrf.mxu0
      %v1753 = vadd.f32 %v1640, %v1752
      %v1754 = vpop.f32.mrf.mxu0
      %v1755 = vadd.f32 %v1642, %v1754
      %v1756 = vpop.f32.mrf.mxu0
      %v1757 = vadd.f32 %v1644, %v1756
      %v1758 = vpop.f32.mrf.mxu0
      %v1759 = vadd.f32 %v1646, %v1758
      %1760 = vmatprep.mubr.bf16.mxu0 0
      %1761 = vmatmul.mubr.bf16.gmra.mxu0 %v1290
      %v1762 = vpop.f32.mrf.mxu0
      %v1763 = vadd.f32 %v1650, %v1762
      %v1764 = vpop.f32.mrf.mxu0
      %v1765 = vadd.f32 %v1652, %v1764
      %v1766 = vpop.f32.mrf.mxu0
      %v1767 = vadd.f32 %v1654, %v1766
      %v1768 = vpop.f32.mrf.mxu0
      %v1769 = vadd.f32 %v1656, %v1768
      %1770 = vmatprep.mubr.bf16.mxu0 0
      %1771 = vmatmul.mubr.bf16.gmra.mxu0 %v1293
      %v1772 = vpop.f32.mrf.mxu0
      %v1773 = vadd.f32 %v1660, %v1772
      %v1774 = vpop.f32.mrf.mxu0
      %v1775 = vadd.f32 %v1662, %v1774
      %v1776 = vpop.f32.mrf.mxu0
      %v1777 = vadd.f32 %v1664, %v1776
      %v1778 = vpop.f32.mrf.mxu0
      %v1779 = vadd.f32 %v1666, %v1778
      %1780 = vmatprep.mubr.bf16.mxu0 0
      %1781 = vmatmul.mubr.bf16.gmra.mxu0 %v1296
      %v1782 = vpop.f32.mrf.mxu0
      %v1783 = vadd.f32 %v1670, %v1782
      %v1784 = vpop.f32.mrf.mxu0
      %v1785 = vadd.f32 %v1672, %v1784
      %v1786 = vpop.f32.mrf.mxu0
      %v1787 = vadd.f32 %v1674, %v1786
      %v1788 = vpop.f32.mrf.mxu0
      %v1789 = vadd.f32 %v1676, %v1788
      %1790 = vmatprep.mubr.bf16.mxu0 0
      %1791 = vmatmul.mubr.bf16.gmra.mxu0 %v1299
      %v1792 = vpop.f32.mrf.mxu0
      %v1793 = vadd.f32 %v1680, %v1792
      %v1794 = vpop.f32.mrf.mxu0
      %v1795 = vadd.f32 %v1682, %v1794
      %v1796 = vpop.f32.mrf.mxu0
      %v1797 = vadd.f32 %v1684, %v1796
      %v1798 = vpop.f32.mrf.mxu0
      %v1799 = vadd.f32 %v1686, %v1798
      %1800 = vdwg.mxu0
      %v1801 = vmax.f32 %v1723, 0.0
      %v1802 = vmax.f32 %v1725, 0.0
      %v1803 = vmax.f32 %v1727, 0.0
      %v1804 = vmax.f32 %v1729, 0.0
      %v1805 = vmax.f32 %v1733, 0.0
      %v1806 = vmax.f32 %v1735, 0.0
      %v1807 = vmax.f32 %v1737, 0.0
      %v1808 = vmax.f32 %v1739, 0.0
      %v1809 = vmax.f32 %v1743, 0.0
      %v1810 = vmax.f32 %v1745, 0.0
      %v1811 = vmax.f32 %v1747, 0.0
      %v1812 = vmax.f32 %v1749, 0.0
      %v1813 = vmax.f32 %v1753, 0.0
      %v1814 = vmax.f32 %v1755, 0.0
      %v1815 = vmax.f32 %v1757, 0.0
      %v1816 = vmax.f32 %v1759, 0.0
      %v1817 = vmax.f32 %v1763, 0.0
      %v1818 = vmax.f32 %v1765, 0.0
      %v1819 = vmax.f32 %v1767, 0.0
      %v1820 = vmax.f32 %v1769, 0.0
      %v1821 = vmax.f32 %v1773, 0.0
      %v1822 = vmax.f32 %v1775, 0.0
      %v1823 = vmax.f32 %v1777, 0.0
      %v1824 = vmax.f32 %v1779, 0.0
      %v1825 = vmax.f32 %v1783, 0.0
      %v1826 = vmax.f32 %v1785, 0.0
      %v1827 = vmax.f32 %v1787, 0.0
      %v1828 = vmax.f32 %v1789, 0.0
      %v1829 = vmax.f32 %v1793, 0.0
      %v1830 = vmax.f32 %v1795, 0.0
      %v1831 = vmax.f32 %v1797, 0.0
      %v1832 = vmax.f32 %v1799, 0.0
      %v1833 = vpack.c.bf16 %v1803, %v1801
      %v1834 = vpack.c.bf16 %v1804, %v1802
      %v1835 = vpack.c.bf16 %v1807, %v1805
      %v1836 = vpack.c.bf16 %v1808, %v1806
      %v1837 = vpack.c.bf16 %v1811, %v1809
      %v1838 = vpack.c.bf16 %v1812, %v1810
      %v1839 = vpack.c.bf16 %v1815, %v1813
      %v1840 = vpack.c.bf16 %v1816, %v1814
      %v1841 = vpack.c.bf16 %v1819, %v1817
      %v1842 = vpack.c.bf16 %v1820, %v1818
      %v1843 = vpack.c.bf16 %v1823, %v1821
      %v1844 = vpack.c.bf16 %v1824, %v1822
      %v1845 = vpack.c.bf16 %v1827, %v1825
      %v1846 = vpack.c.bf16 %v1828, %v1826
      %v1847 = vpack.c.bf16 %v1831, %v1829
      %v1848 = vpack.c.bf16 %v1832, %v1830
      %v1849 = vld [vmem:[%s3] sm:$0xff]
      %v1850 = vld [vmem:[%s3 + $0x8] sm:$0xff]
      %v1851 = vld [vmem:[%s3 + $0x10] sm:$0xff]
      %v1852 = vld [vmem:[%s3 + $0x18] sm:$0xff]
      %v1853 = vld [vmem:[%s3 + $0x20] sm:$0xff]
      %v1854 = vld [vmem:[%s3 + $0x28] sm:$0xff]
      %v1855 = vld [vmem:[%s3 + $0x30] sm:$0xff]
      %v1856 = vld [vmem:[%s3 + $0x38] sm:$0xff]
      %v1857 = vld [vmem:[%s3 + $0x40] sm:$0xff]
      %v1858 = vld [vmem:[%s3 + $0x48] sm:$0xff]
      %v1859 = vld [vmem:[%s3 + $0x50] sm:$0xff]
      %v1860 = vld [vmem:[%s3 + $0x58] sm:$0xff]
      %v1861 = vld [vmem:[%s3 + $0x60] sm:$0xff]
      %v1862 = vld [vmem:[%s3 + $0x68] sm:$0xff]
      %v1863 = vld [vmem:[%s3 + $0x70] sm:$0xff]
      %v1864 = vld [vmem:[%s3 + $0x78] sm:$0xff]
      %v1865 = vld [vmem:[%s4] sm:$0x1]
      %v1867 = vlaneseq
      %v1868 = vshrl.u32 %v1867, 7
      %v1869 = vsub.s32 0, %v1868
      %v1870 = vrot.slane %v1865, %v1869
      %v1888 = vunpack.c.l.b16 %v1849
      %v1889 = vunpack.c.h.b16 %v1849
      %v1890 = vunpack.c.l.b16 %v1850
      %v1891 = vunpack.c.h.b16 %v1850
      %v1892 = vunpack.c.l.b16 %v1851
      %v1893 = vunpack.c.h.b16 %v1851
      %v1894 = vunpack.c.l.b16 %v1852
      %v1895 = vunpack.c.h.b16 %v1852
      %v1896 = vunpack.c.l.b16 %v1853
      %v1897 = vunpack.c.h.b16 %v1853
      %v1898 = vunpack.c.l.b16 %v1854
      %v1899 = vunpack.c.h.b16 %v1854
      %v1900 = vunpack.c.l.b16 %v1855
      %v1901 = vunpack.c.h.b16 %v1855
      %v1902 = vunpack.c.l.b16 %v1856
      %v1903 = vunpack.c.h.b16 %v1856
      %v1904 = vunpack.c.l.b16 %v1857
      %v1905 = vunpack.c.h.b16 %v1857
      %v1906 = vunpack.c.l.b16 %v1858
      %v1907 = vunpack.c.h.b16 %v1858
      %v1908 = vunpack.c.l.b16 %v1859
      %v1909 = vunpack.c.h.b16 %v1859
      %v1910 = vunpack.c.l.b16 %v1860
      %v1911 = vunpack.c.h.b16 %v1860
      %v1912 = vunpack.c.l.b16 %v1861
      %v1913 = vunpack.c.h.b16 %v1861
      %v1914 = vunpack.c.l.b16 %v1862
      %v1915 = vunpack.c.h.b16 %v1862
      %v1916 = vunpack.c.l.b16 %v1863
      %v1917 = vunpack.c.h.b16 %v1863
      %v1918 = vunpack.c.l.b16 %v1864
      %v1919 = vunpack.c.h.b16 %v1864
      %v1920 = vpack.c.b16 %v1890, %v1888
      %v1921 = vpack.c.b16 %v1891, %v1889
      %v1922 = vpack.c.b16 %v1894, %v1892
      %v1923 = vpack.c.b16 %v1895, %v1893
      %v1924 = vpack.c.b16 %v1898, %v1896
      %v1925 = vpack.c.b16 %v1899, %v1897
      %v1926 = vpack.c.b16 %v1902, %v1900
      %v1927 = vpack.c.b16 %v1903, %v1901
      %v1928 = vpack.c.b16 %v1906, %v1904
      %v1929 = vpack.c.b16 %v1907, %v1905
      %v1930 = vpack.c.b16 %v1910, %v1908
      %v1931 = vpack.c.b16 %v1911, %v1909
      %v1932 = vpack.c.b16 %v1914, %v1912
      %v1933 = vpack.c.b16 %v1915, %v1913
      %v1934 = vpack.c.b16 %v1918, %v1916
      %v1935 = vpack.c.b16 %v1919, %v1917
      %1952 = vmatprep.subr.bf16.mxu0 %v1935
      %1953 = vmatpush1.bf16.xpose.msra.mxu0 %v1934
      %1954 = vmatprep.subr.bf16.mxu0 %v1933
      %1955 = vmatpush1.bf16.xpose.msra.mxu0 %v1932
      %1956 = vmatprep.subr.bf16.mxu0 %v1931
      %1957 = vmatpush1.bf16.xpose.msra.mxu0 %v1930
      %1958 = vmatprep.subr.bf16.mxu0 %v1929
      %1959 = vmatpush1.bf16.xpose.msra.mxu0 %v1928
      %1960 = vmatprep.subr.bf16.mxu0 %v1927
      %1961 = vmatpush1.bf16.xpose.msra.mxu0 %v1926
      %1962 = vmatprep.subr.bf16.mxu0 %v1925
      %1963 = vmatpush1.bf16.xpose.msra.mxu0 %v1924
      %1964 = vmatprep.subr.bf16.mxu0 %v1923
      %1965 = vmatpush1.bf16.xpose.msra.mxu0 %v1922
      %1966 = vmatprep.subr.bf16.mxu0 %v1921
      %1967 = vmatpush1.bf16.xpose.msra.mxu0 %v1920
      %1968 = vmatprep.subr.bf16.mxu0 0
      %1969 = vmatpush2.bf16.xpose.msra.mxu0 0
      %1970 = vmatprep.subr.bf16.mxu0 0
      %1971 = vmatpush2.bf16.xpose.msra.mxu0 0
      %1972 = vmatprep.subr.bf16.mxu0 0
      %1973 = vmatpush2.bf16.xpose.msra.mxu0 0
      %1974 = vmatprep.subr.bf16.mxu0 0
      %1975 = vmatpush2.bf16.xpose.msra.mxu0 0
      %1976 = vmatprep.subr.bf16.mxu0 0
      %1977 = vmatpush2.bf16.xpose.msra.mxu0 0
      %1978 = vmatprep.subr.bf16.mxu0 0
      %1979 = vmatpush2.bf16.xpose.msra.mxu0 0
      %1980 = vmatprep.subr.bf16.mxu0 0
      %1981 = vmatpush2.bf16.xpose.msra.mxu0 0
      %1982 = vmatprep.subr.bf16.mxu0 0
      %1983 = vmatpush2.bf16.xpose.msra.mxu0 0
      %1984 = vmatprep.mubr.bf16.mxu0 %v1834
      %1985 = vmatmul.mubr.bf16.gmra.mxu0 %v1833
      %v1986 = vpop.f32.mrf.mxu0
      %v1987 = vadd.f32 %v1870, %v1986
      %v1988 = vpop.f32.mrf.mxu0
      %v1989 = vpop.f32.mrf.mxu0
      %v1990 = vadd.f32 %v1870, %v1989
      %v1991 = vpop.f32.mrf.mxu0
      %1992 = vmatprep.mubr.bf16.mxu0 %v1836
      %1993 = vmatmul.mubr.bf16.gmra.mxu0 %v1835
      %v1994 = vpop.f32.mrf.mxu0
      %v1995 = vadd.f32 %v1870, %v1994
      %v1996 = vpop.f32.mrf.mxu0
      %v1997 = vpop.f32.mrf.mxu0
      %v1998 = vadd.f32 %v1870, %v1997
      %v1999 = vpop.f32.mrf.mxu0
      %2000 = vmatprep.mubr.bf16.mxu0 %v1838
      %2001 = vmatmul.mubr.bf16.gmra.mxu0 %v1837
      %v2002 = vpop.f32.mrf.mxu0
      %v2003 = vadd.f32 %v1870, %v2002
      %v2004 = vpop.f32.mrf.mxu0
      %v2005 = vpop.f32.mrf.mxu0
      %v2006 = vadd.f32 %v1870, %v2005
      %v2007 = vpop.f32.mrf.mxu0
      %2008 = vmatprep.mubr.bf16.mxu0 %v1840
      %2009 = vmatmul.mubr.bf16.gmra.mxu0 %v1839
      %v2010 = vpop.f32.mrf.mxu0
      %v2011 = vadd.f32 %v1870, %v2010
      %v2012 = vpop.f32.mrf.mxu0
      %v2013 = vpop.f32.mrf.mxu0
      %v2014 = vadd.f32 %v1870, %v2013
      %v2015 = vpop.f32.mrf.mxu0
      %2016 = vmatprep.mubr.bf16.mxu0 %v1842
      %2017 = vmatmul.mubr.bf16.gmra.mxu0 %v1841
      %v2018 = vpop.f32.mrf.mxu0
      %v2019 = vadd.f32 %v1870, %v2018
      %v2020 = vpop.f32.mrf.mxu0
      %v2021 = vpop.f32.mrf.mxu0
      %v2022 = vadd.f32 %v1870, %v2021
      %v2023 = vpop.f32.mrf.mxu0
      %2024 = vmatprep.mubr.bf16.mxu0 %v1844
      %2025 = vmatmul.mubr.bf16.gmra.mxu0 %v1843
      %v2026 = vpop.f32.mrf.mxu0
      %v2027 = vadd.f32 %v1870, %v2026
      %v2028 = vpop.f32.mrf.mxu0
      %v2029 = vpop.f32.mrf.mxu0
      %v2030 = vadd.f32 %v1870, %v2029
      %v2031 = vpop.f32.mrf.mxu0
      %2032 = vmatprep.mubr.bf16.mxu0 %v1846
      %2033 = vmatmul.mubr.bf16.gmra.mxu0 %v1845
      %v2034 = vpop.f32.mrf.mxu0
      %v2035 = vadd.f32 %v1870, %v2034
      %v2036 = vpop.f32.mrf.mxu0
      %v2037 = vpop.f32.mrf.mxu0
      %v2038 = vadd.f32 %v1870, %v2037
      %v2039 = vpop.f32.mrf.mxu0
      %2040 = vmatprep.mubr.bf16.mxu0 %v1848
      %2041 = vmatmul.mubr.bf16.gmra.mxu0 %v1847
      %v2042 = vpop.f32.mrf.mxu0
      %v2043 = vadd.f32 %v1870, %v2042
      %v2044 = vpop.f32.mrf.mxu0
      %v2045 = vpop.f32.mrf.mxu0
      %v2046 = vadd.f32 %v1870, %v2045
      %v2047 = vpop.f32.mrf.mxu0
      %2048 = vdwg.mxu0
      %v2049 = vmax.f32 %v1987, 0.0
      %v2050 = vmax.f32 %v1990, 0.0
      %v2051 = vmax.f32 %v1995, 0.0
      %v2052 = vmax.f32 %v1998, 0.0
      %v2053 = vmax.f32 %v2003, 0.0
      %v2054 = vmax.f32 %v2006, 0.0
      %v2055 = vmax.f32 %v2011, 0.0
      %v2056 = vmax.f32 %v2014, 0.0
      %v2057 = vmax.f32 %v2019, 0.0
      %v2058 = vmax.f32 %v2022, 0.0
      %v2059 = vmax.f32 %v2027, 0.0
      %v2060 = vmax.f32 %v2030, 0.0
      %v2061 = vmax.f32 %v2035, 0.0
      %v2062 = vmax.f32 %v2038, 0.0
      %v2063 = vmax.f32 %v2043, 0.0
      %v2064 = vmax.f32 %v2046, 0.0
      %2065 = vst [vmem:[%s229] sm:$0xff] %v2049
      %2066 = vst [vmem:[%s229 + $0x8] sm:$0xff] %v2050
      %2067 = vst [vmem:[%s229 + $0x10] sm:$0xff] %v2051
      %2068 = vst [vmem:[%s229 + $0x18] sm:$0xff] %v2052
      %2069 = vst [vmem:[%s229 + $0x20] sm:$0xff] %v2053
      %2070 = vst [vmem:[%s229 + $0x28] sm:$0xff] %v2054
      %2071 = vst [vmem:[%s229 + $0x30] sm:$0xff] %v2055
      %2072 = vst [vmem:[%s229 + $0x38] sm:$0xff] %v2056
      %2073 = vst [vmem:[%s229 + $0x40] sm:$0xff] %v2057
      %2074 = vst [vmem:[%s229 + $0x48] sm:$0xff] %v2058
      %2075 = vst [vmem:[%s229 + $0x50] sm:$0xff] %v2059
      %2076 = vst [vmem:[%s229 + $0x58] sm:$0xff] %v2060
      %2077 = vst [vmem:[%s229 + $0x60] sm:$0xff] %v2061
      %2078 = vst [vmem:[%s229 + $0x68] sm:$0xff] %v2062
      %2079 = vst [vmem:[%s229 + $0x70] sm:$0xff] %v2063
      %2080 = vst [vmem:[%s229 + $0x78] sm:$0xff] %v2064
      %s2081 = smul.u32 16, %s16
      %p2082 = scmp.lt.s32.totalorder %s2081, 31
      %s2083 = scalar_select %p2082, %s2081, 31
      %s2084 = smul.addr %s2083, 8
      %s2085 = scalar_lea.vmem %s5, %s2084
      // Predicated region
      $region41: #{mnist_net_forward.1} parent=39 // pred_check
        %p2086 = pneg %p144
      $region42: #{mnist_net_forward.1} parent=39 // pred_check_branch
        %2088 = sbr.rel (%p2086) target = $region44
      $region43: #{mnist_net_forward.1} parent=39 // pred_region
        %s2089 = smul.u32 16, %s16
      $region44: #{mnist_net_forward.1} parent=39 // pred_fallthru
        _
    $region40: #{mnist_net_forward.1} parent=5 // pred_fallthru
      _
    %p2090 = scmp.le.s32.totalorder 2, %s11
    // Predicated region
    $region45: #{mnist_net_forward.1} parent=5 // pred_check
      %p2091 = pneg %p2090
    $region46: #{mnist_net_forward.1} parent=5 // pred_check_branch
      %2093 = sbr.rel (%p2091) target = $region48
    $region47: #{mnist_net_forward.1} parent=5 // pred_region
      %s2094 = ssub.s32 %s11, 2
      // Predicated region
      $region49: #{mnist_net_forward.1} parent=47 // pred_check
        %p2095 = pneg %p150
      $region50: #{mnist_net_forward.1} parent=47 // pred_check_branch
        %2097 = sbr.rel (%p2095) target = $region52
      $region51: #{mnist_net_forward.1} parent=47 // pred_region
        %s2098 = smul.u32 16, %s17
        %p2099 = scmp.lt.s32.totalorder %s2098, 31
        %s2100 = scalar_select %p2099, %s2098, 31
        %s2101 = smul.addr %s2100, 8
        %s2102 = scalar_lea.vmem %s5, %s2101
      $region52: #{mnist_net_forward.1} parent=47 // pred_fallthru
        _
    $region48: #{mnist_net_forward.1} parent=5 // pred_fallthru
      _
  $region6: #{mnist_net_forward.1} parent=0 // loop_footer
    %s15 = sadd.s32 1, %s11
  $region7: #{mnist_net_forward.1} parent=0 // loop_footer_branch
    %10 = sbr.rel target = $region3
  $region8: #{mnist_net_forward.1} parent=0 // loop_exit
    _

</llo_original>
